<compile_context>
chip_gen: v6e
topology: v6e:2x2x1
jax: 0.10.0
libtpu: 0.0.40
codegen_flags: <defaults>
</compile_context>

<pallas_src>
import functools

import jax
import jax.numpy as jnp
from jax.experimental import pallas as pl
from jax.experimental.pallas import tpu as pltpu


LANE = 128
MAX_TM = 2048            # row-tile cap (output rows per grid step)
MAX_TK = 1024            # K (aggregation) tile cap
VMEM_BUDGET = 36 << 20   # working-set budget: safe on v7x (64 MiB physical VMEM)
NEG_BIG = -1e30          # mask value for padded class columns (f32 accumulator only)


def _round_up(x, m):
    return (x + m - 1) // m * m


def _pick_tile(n_pad, cap, min_tiles=1):
    """Largest multiple-of-LANE divisor of n_pad that is <= cap and leaves at
    least `min_tiles` tiles along that axis."""
    q = n_pad // LANE
    best = LANE
    for d in range(1, q + 1):
        if q % d:
            continue
        t = d * LANE
        if t <= cap and (n_pad // t) >= min_tiles:
            best = max(best, t)
    return best


def _stage_vmem_bytes(tm, tk, h_p, f_out_p, adj_bufs):
    """Rough VMEM estimate (bytes) for the heavier of stage 2 / stage 3."""
    bf16, f32 = 2, 4
    stage2 = (adj_bufs * tm * tk * bf16        # adjacency stream
              + 2 * tk * h_p * bf16            # xw1 stream
              + 2 * h_p * f_out_p * bf16       # resident W2
              + tm * h_p * f32                 # f32 accumulator
              + 2 * tm * f_out_p * bf16)       # output tile
    stage3 = (adj_bufs * tm * tk * bf16
              + 2 * tk * f_out_p * bf16
              + tm * f_out_p * f32
              + 2 * tm * f_out_p * f32)
    return max(stage2, stage3)


def _adj_spec(tm, tk, buffers):
    """Adjacency BlockSpec; 3-deep pipelining when there is enough to stream."""
    idx = lambda i, k: (i, k)
    if buffers > 2:
        try:
            return pl.BlockSpec((tm, tk), idx, pipeline_mode=pl.Buffered(buffers))
        except TypeError:  # older BlockSpec signature without pipeline_mode
            pass
    return pl.BlockSpec((tm, tk), idx)


# ---------------------------------------------------------------------------
# Kernels
# ---------------------------------------------------------------------------
def _project_kernel(x_ref, w_ref, o_ref):
    """o = x @ W  (row tile of x, full small W resident in VMEM)."""
    o_ref[...] = jnp.dot(
        x_ref[...], w_ref[...], preferred_element_type=jnp.float32
    ).astype(o_ref.dtype)


def _agg_relu_project_kernel(adj_ref, xw_ref, w2_ref, o_ref, acc_ref):
    """Per row tile i: acc = sum_k A[i,k] @ xw1[k]; then o = relu(acc) @ W2."""
    k = pl.program_id(1)

    @pl.when(k == 0)
    def _():
        acc_ref[...] = jnp.zeros_like(acc_ref)

    acc_ref[...] += jnp.dot(
        adj_ref[...], xw_ref[...], preferred_element_type=jnp.float32
    )

    @pl.when(k == pl.num_programs(1) - 1)
    def _():
        h1 = jnp.maximum(acc_ref[...], 0.0).astype(w2_ref.dtype)
        # F.dropout(x, training=self.training): identity in eval mode.
        o_ref[...] = jnp.dot(
            h1, w2_ref[...], preferred_element_type=jnp.float32
        ).astype(o_ref.dtype)


def _agg_logsoftmax_kernel(adj_ref, xw_ref, o_ref, acc_ref, *,
                           num_classes, needs_mask):
    """Per row tile i: acc = sum_k A[i,k] @ xw2[k]; then masked log_softmax."""
    k = pl.program_id(1)

    @pl.when(k == 0)
    def _():
        acc_ref[...] = jnp.zeros_like(acc_ref)

    acc_ref[...] += jnp.dot(
        adj_ref[...], xw_ref[...], preferred_element_type=jnp.float32
    )

    @pl.when(k == pl.num_programs(1) - 1)
    def _():
        logits = acc_ref[...]
        if needs_mask:  # only when classes are not already a lane multiple
            col = jax.lax.broadcasted_iota(jnp.int32, logits.shape, 1)
            logits = jnp.where(col < num_classes, logits, NEG_BIG)
        m = jnp.max(logits, axis=1, keepdims=True)
        shifted = logits - m
        lse = jnp.log(jnp.sum(jnp.exp(shifted), axis=1, keepdims=True))
        o_ref[...] = (shifted - lse).astype(o_ref.dtype)


# ---------------------------------------------------------------------------
# Graph setup (static, once per graph — like ManualGCN.__init__)
# ---------------------------------------------------------------------------
def normalize_adj(edge_index, num_nodes):
    """JAX glue reproducing ManualGCN._normalize_adj (f32)."""
    A = jnp.zeros((num_nodes, num_nodes), jnp.float32)
    A = A.at[edge_index[0], edge_index[1]].set(1.0)
    A = A + jnp.eye(num_nodes, dtype=jnp.float32)
    degree = A.sum(axis=1)
    d_inv_sqrt = jnp.power(degree, -0.5)
    d_inv_sqrt = jnp.where(jnp.isinf(d_inv_sqrt), 0.0, d_inv_sqrt)
    D = jnp.diag(d_inv_sqrt)
    return D @ A @ D


def prepare_adjacency(edge_index, num_nodes):
    """Build normalized A once: padded to lane-dense [n_pad, n_pad] bf16.

    Hoisted out of the per-forward path so the O(N^2) pad + cast never adds
    to the per-call HBM traffic. Returns (padded bf16 A, f32 A for reference).
    """
    a = normalize_adj(edge_index, num_nodes)
    n_pad = _round_up(num_nodes, LANE)
    adj_p = jnp.zeros((n_pad, n_pad), jnp.bfloat16)
    adj_p = adj_p.at[:num_nodes, :num_nodes].set(a.astype(jnp.bfloat16))
    return adj_p, a


# ---------------------------------------------------------------------------
# Forward
# ---------------------------------------------------------------------------
def manual_gcn_forward(adj_p, x, w1, w2):
    """ManualGCN forward (eval mode).

    adj_p : [n_pad, n_pad] bf16 lane-dense normalized adjacency (static, from
            prepare_adjacency; NOT rebuilt per call).
    x     : [n, f_in] node features.
    w1,w2 : nn.Linear weights stored pre-transposed as [in, out].
    """
    n, f_in = x.shape
    n_pad = adj_p.shape[0]
    h_dim = w1.shape[1]
    f_out = w2.shape[1]

    f_in_p = _round_up(f_in, LANE)
    h_p = _round_up(h_dim, LANE)
    f_out_p = _round_up(f_out, LANE)

    # Decoupled row / K tiles: lane-multiple divisors of n_pad, shrunk until
    # the estimated VMEM working set fits the (v7x-safe) budget.
    cap = MAX_TM
    while True:
        tm = _pick_tile(n_pad, cap, min_tiles=2 if n_pad >= 2 * LANE else 1)
        tk = _pick_tile(n_pad, min(MAX_TK, cap))
        m_tiles, k_tiles = n_pad // tm, n_pad // tk
        adj_bufs = 3 if m_tiles * k_tiles >= 3 else 2
        vmem_need = _stage_vmem_bytes(tm, tk, h_p, f_out_p, adj_bufs)
        if vmem_need <= VMEM_BUDGET or cap <= LANE:
            break
        cap //= 2
    vmem_limit = int(min(max(vmem_need + (4 << 20), 32 << 20), 48 << 20))

    # Pad the cheap O(N*F) operands per call (the O(N^2) A is pre-padded).
    x_p = jnp.zeros((n_pad, f_in_p), jnp.bfloat16).at[:n, :f_in].set(
        x.astype(jnp.bfloat16))
    w1_p = jnp.zeros((f_in_p, h_p), jnp.bfloat16).at[:f_in, :h_dim].set(
        w1.astype(jnp.bfloat16))
    w2_p = jnp.zeros((h_p, f_out_p), jnp.bfloat16).at[:h_dim, :f_out].set(
        w2.astype(jnp.bfloat16))

    # ---- stage 1: xw1 = x @ W1 (projection before aggregation) ----
    xw1 = pl.pallas_call(
        _project_kernel,
        out_shape=jax.ShapeDtypeStruct((n_pad, h_p), jnp.bfloat16),
        grid=(m_tiles,),
        in_specs=[
            pl.BlockSpec((tm, f_in_p), lambda i: (i, 0)),
            pl.BlockSpec((f_in_p, h_p), lambda i: (0, 0)),
        ],
        out_specs=pl.BlockSpec((tm, h_p), lambda i: (i, 0)),
        compiler_params=pltpu.CompilerParams(
            dimension_semantics=("parallel",),
            vmem_limit_bytes=vmem_limit),
    )(x_p, w1_p)

    # ---- stage 2: xw2 = relu(A @ xw1) @ W2 (agg + relu + layer-2 projection) ----
    xw2 = pl.pallas_call(
        _agg_relu_project_kernel,
        out_shape=jax.ShapeDtypeStruct((n_pad, f_out_p), jnp.bfloat16),
        grid=(m_tiles, k_tiles),
        in_specs=[
            _adj_spec(tm, tk, adj_bufs),
            pl.BlockSpec((tk, h_p), lambda i, k: (k, 0)),
            pl.BlockSpec((h_p, f_out_p), lambda i, k: (0, 0)),
        ],
        out_specs=pl.BlockSpec((tm, f_out_p), lambda i, k: (i, 0)),
        scratch_shapes=[pltpu.VMEM((tm, h_p), jnp.float32)],
        compiler_params=pltpu.CompilerParams(
            dimension_semantics=("parallel", "arbitrary"),
            vmem_limit_bytes=vmem_limit),
    )(adj_p, xw1, w2_p)

    # ---- stage 3: out = log_softmax(A @ xw2, axis=1) ----
    out_p = pl.pallas_call(
        functools.partial(_agg_logsoftmax_kernel,
                          num_classes=f_out,
                          needs_mask=(f_out != f_out_p)),
        out_shape=jax.ShapeDtypeStruct((n_pad, f_out_p), jnp.float32),
        grid=(m_tiles, k_tiles),
        in_specs=[
            _adj_spec(tm, tk, adj_bufs),
            pl.BlockSpec((tk, f_out_p), lambda i, k: (k, 0)),
        ],
        out_specs=pl.BlockSpec((tm, f_out_p), lambda i, k: (i, 0)),
        scratch_shapes=[pltpu.VMEM((tm, f_out_p), jnp.float32)],
        compiler_params=pltpu.CompilerParams(
            dimension_semantics=("parallel", "arbitrary"),
            vmem_limit_bytes=vmem_limit),
    )(adj_p, xw2)

    return out_p[:n, :f_out]


def reference_forward(adjm, x, w1, w2):
    """Pure-JAX f32 reference for tolerance checking."""
    h1 = jnp.maximum(adjm @ x @ w1, 0.0)
    logits = adjm @ h1 @ w2
    return jax.nn.log_softmax(logits, axis=1)


if __name__ == "__main__":
    # Small deterministic problem: 16 nodes, 32 input feats, 32 hidden, 8 classes.
    num_nodes, input_dim, hidden_dim, output_dim = 16, 32, 32, 8

    key = jax.random.PRNGKey(0)
    kx, kw1, kw2 = jax.random.split(key, 3)

    # Deterministic bidirectional ring graph as edge_index.
    src = jnp.arange(num_nodes, dtype=jnp.int32)
    dst = (src + 1) % num_nodes
    edge_index = jnp.stack(
        [jnp.concatenate([src, dst]), jnp.concatenate([dst, src])], axis=0
    )

    # Static per-graph setup (ManualGCN.__init__): normalize + pad + cast once.
    adj_p, adj_f32 = prepare_adjacency(edge_index, num_nodes)

    x = jax.random.normal(kx, (num_nodes, input_dim), jnp.float32)   # data.x
    # nn.Linear(in, out, bias=False) weights, stored pre-transposed [in, out].
    w1 = jax.random.normal(kw1, (input_dim, hidden_dim), jnp.float32) * 0.1
    w2 = jax.random.normal(kw2, (hidden_dim, output_dim), jnp.float32) * 0.1

    fwd = jax.jit(manual_gcn_forward)
    out = fwd(adj_p, x, w1, w2)
    jax.block_until_ready(out)

    # sanity: shape, valid log-probs, and agreement with the f32 reference
    assert out.shape == (num_nodes, output_dim)
    assert jnp.allclose(jnp.exp(out).sum(axis=1), 1.0, atol=1e-4)
    ref = reference_forward(adj_f32, x, w1, w2)
    assert jnp.allclose(out, ref, atol=5e-2, rtol=5e-2), (
        float(jnp.max(jnp.abs(out - ref))))

    print("KERNEL_OK")
</pallas_src>

<mosaic_0001>
module attributes {stable_mosaic.version = 11 : i64} {
  func.func @_project_kernel(%arg0: i32, %arg1: memref<128x128xbf16, #tpu.memory_space<vmem>>, %arg2: memref<128x128xbf16, #tpu.memory_space<vmem>>, %arg3: memref<128x128xbf16, #tpu.memory_space<vmem>>) attributes {dimension_semantics = [#tpu.dimension_semantics<parallel>], iteration_bounds = array<i64: 1>, scalar_prefetch = 0 : i64, scratch_operands = 0 : i64, tpu.core_type = #tpu.core_type<tc>, window_params = [{transform_indices = @transform_0, window_bounds = array<i64: 128, 128>}, {pipeline_mode = #tpu.pipeline_mode<synchronous>, transform_indices = @transform_1, window_bounds = array<i64: 128, 128>}, {transform_indices = @transform_2, window_bounds = array<i64: 128, 128>}]} {
    %c0 = arith.constant 0 : index
    %c0_0 = arith.constant 0 : index
    %0 = vector.load %arg1[%c0, %c0_0] : memref<128x128xbf16, #tpu.memory_space<vmem>>, vector<128x128xbf16>
    %c0_1 = arith.constant 0 : index
    %c0_2 = arith.constant 0 : index
    %1 = vector.load %arg2[%c0_1, %c0_2] : memref<128x128xbf16, #tpu.memory_space<vmem>>, vector<128x128xbf16>
    %cst = arith.constant dense<0.000000e+00> : vector<128x128xf32>
    %2 = tpu.matmul %0, %1, %cst {dimension_numbers = #tpu.dot_dimension_numbers<[1], [0], [0], [1], [0, 0, 1, 1], [], []>} : vector<128x128xbf16>, vector<128x128xbf16>, vector<128x128xf32> -> vector<128x128xf32>
    %3 = arith.truncf %2 : vector<128x128xf32> to vector<128x128xbf16>
    %c0_3 = arith.constant 0 : index
    %c0_4 = arith.constant 0 : index
    %4 = vector.load %arg3[%c0_3, %c0_4] : memref<128x128xbf16, #tpu.memory_space<vmem>>, vector<128x128xbf16>
    tpu.vector_store %arg3[%c0_3, %c0_4], %3 {strides = array<i32>} : memref<128x128xbf16, #tpu.memory_space<vmem>>, vector<128x128xbf16>,
    return
  }
  func.func @transform_0(%arg0: i32) -> (i32, i32) {
    %c0_i32 = arith.constant 0 : i32
    %c0_i32_0 = arith.constant 0 : i32
    return %arg0, %c0_i32 : i32, i32
  }
  func.func @transform_1(%arg0: i32) -> (i32, i32) {
    %c0_i32 = arith.constant 0 : i32
    %c0_i32_0 = arith.constant 0 : i32
    %c0_i32_1 = arith.constant 0 : i32
    return %c0_i32, %c0_i32_0 : i32, i32
  }
  func.func @transform_2(%arg0: i32) -> (i32, i32) {
    %c0_i32 = arith.constant 0 : i32
    %c0_i32_0 = arith.constant 0 : i32
    return %arg0, %c0_i32 : i32, i32
  }
}

module attributes {stable_mosaic.version = 11 : i64} {
  func.func @_agg_logsoftmax_kernel(%arg0: i32, %arg1: i32, %arg2: memref<128x128xbf16, #tpu.memory_space<vmem>>, %arg3: memref<128x128xbf16, #tpu.memory_space<vmem>>, %arg4: memref<128x128xf32, #tpu.memory_space<vmem>>, %arg5: memref<128x128xf32, #tpu.memory_space<vmem>>) attributes {dimension_semantics = [#tpu.dimension_semantics<parallel>, #tpu.dimension_semantics<arbitrary>], iteration_bounds = array<i64: 1, 1>, scalar_prefetch = 0 : i64, scratch_operands = 1 : i64, tpu.core_type = #tpu.core_type<tc>, window_params = [{transform_indices = @transform_0, window_bounds = array<i64: 128, 128>}, {transform_indices = @transform_1, window_bounds = array<i64: 128, 128>}, {transform_indices = @transform_2, window_bounds = array<i64: 128, 128>}]} {
    %c0_i32 = arith.constant 0 : i32
    %0 = arith.cmpi eq, %arg1, %c0_i32 : i32
    %1 = arith.extui %0 : i1 to i32
    %c0_i32_0 = arith.constant 0 : i32
    %2 = arith.cmpi ne, %1, %c0_i32_0 : i32
    scf.if %2 {
      %cst_10 = arith.constant 0.000000e+00 : f32
      %12 = vector.broadcast %cst_10 : f32 to vector<128x128xf32>
      %c0_11 = arith.constant 0 : index
      %c0_12 = arith.constant 0 : index
      %13 = vector.load %arg5[%c0_11, %c0_12] : memref<128x128xf32, #tpu.memory_space<vmem>>, vector<128x128xf32>
      tpu.vector_store %arg5[%c0_11, %c0_12], %12 {strides = array<i32>} : memref<128x128xf32, #tpu.memory_space<vmem>>, vector<128x128xf32>,
    } else {
    }
    %c0 = arith.constant 0 : index
    %c0_1 = arith.constant 0 : index
    %3 = vector.load %arg5[%c0, %c0_1] : memref<128x128xf32, #tpu.memory_space<vmem>>, vector<128x128xf32>
    %c0_2 = arith.constant 0 : index
    %c0_3 = arith.constant 0 : index
    %4 = vector.load %arg2[%c0_2, %c0_3] : memref<128x128xbf16, #tpu.memory_space<vmem>>, vector<128x128xbf16>
    %c0_4 = arith.constant 0 : index
    %c0_5 = arith.constant 0 : index
    %5 = vector.load %arg3[%c0_4, %c0_5] : memref<128x128xbf16, #tpu.memory_space<vmem>>, vector<128x128xbf16>
    %cst = arith.constant dense<0.000000e+00> : vector<128x128xf32>
    %6 = tpu.matmul %4, %5, %cst {dimension_numbers = #tpu.dot_dimension_numbers<[1], [0], [0], [1], [0, 0, 1, 1], [], []>} : vector<128x128xbf16>, vector<128x128xbf16>, vector<128x128xf32> -> vector<128x128xf32>
    %7 = arith.addf %3, %6 : vector<128x128xf32>
    %c0_6 = arith.constant 0 : index
    %c0_7 = arith.constant 0 : index
    %8 = vector.load %arg5[%c0_6, %c0_7] : memref<128x128xf32, #tpu.memory_space<vmem>>, vector<128x128xf32>
    tpu.vector_store %arg5[%c0_6, %c0_7], %7 {strides = array<i32>} : memref<128x128xf32, #tpu.memory_space<vmem>>, vector<128x128xf32>,
    %c0_i32_8 = arith.constant 0 : i32
    %9 = arith.cmpi eq, %arg1, %c0_i32_8 : i32
    %10 = arith.extui %9 : i1 to i32
    %c0_i32_9 = arith.constant 0 : i32
    %11 = arith.cmpi ne, %10, %c0_i32_9 : i32
    scf.if %11 {
      %c0_10 = arith.constant 0 : index
      %c0_11 = arith.constant 0 : index
      %12 = vector.load %arg5[%c0_10, %c0_11] : memref<128x128xf32, #tpu.memory_space<vmem>>, vector<128x128xf32>
      %13 = tpu.iota {dimensions = array<i32: 1>} : vector<128x128xi32>
      %c8_i32 = arith.constant 8 : i32
      %14 = vector.broadcast %c8_i32 : i32 to vector<128x128xi32>
      %15 = arith.cmpi slt, %13, %14 : vector<128x128xi32>
      %cst_12 = arith.constant -1.000000e+30 : f32
      %16 = vector.broadcast %cst_12 : f32 to vector<128x128xf32>
      %17 = arith.select %15, %12, %16 : vector<128x128xi1>, vector<128x128xf32>
      %cst_13 = arith.constant dense<0xFF800000> : vector<128xf32>
      %18 = vector.multi_reduction <maximumf>, %17, %cst_13 [1] : vector<128x128xf32> to vector<128xf32>
      %19 = vector.shape_cast %18 : vector<128xf32> to vector<128x1xf32>
      %20 = vector.broadcast %19 : vector<128x1xf32> to vector<128x128xf32>
      %21 = arith.subf %17, %20 : vector<128x128xf32>
      %22 = math.exp %21 : vector<128x128xf32>
      %cst_14 = arith.constant dense<0.000000e+00> : vector<128xf32>
      %23 = vector.multi_reduction <add>, %22, %cst_14 [1] : vector<128x128xf32> to vector<128xf32>
      %24 = vector.shape_cast %23 : vector<128xf32> to vector<128x1xf32>
      %25 = math.log %24 : vector<128x1xf32>
      %26 = vector.broadcast %25 : vector<128x1xf32> to vector<128x128xf32>
      %27 = arith.subf %21, %26 : vector<128x128xf32>
      %c0_15 = arith.constant 0 : index
      %c0_16 = arith.constant 0 : index
      %28 = vector.load %arg4[%c0_15, %c0_16] : memref<128x128xf32, #tpu.memory_space<vmem>>, vector<128x128xf32>
      tpu.vector_store %arg4[%c0_15, %c0_16], %27 {strides = array<i32>} : memref<128x128xf32, #tpu.memory_space<vmem>>, vector<128x128xf32>,
    } else {
    }
    return
  }
  func.func @transform_0(%arg0: i32, %arg1: i32) -> (i32, i32) {
    %c0_i32 = arith.constant 0 : i32
    return %arg0, %arg1 : i32, i32
  }
  func.func @transform_1(%arg0: i32, %arg1: i32) -> (i32, i32) {
    %c0_i32 = arith.constant 0 : i32
    %c0_i32_0 = arith.constant 0 : i32
    return %arg1, %c0_i32 : i32, i32
  }
  func.func @transform_2(%arg0: i32, %arg1: i32) -> (i32, i32) {
    %c0_i32 = arith.constant 0 : i32
    %c0_i32_0 = arith.constant 0 : i32
    return %arg0, %c0_i32 : i32, i32
  }
}

module attributes {stable_mosaic.version = 11 : i64} {
  func.func @_agg_relu_project_kernel(%arg0: i32, %arg1: i32, %arg2: memref<128x128xbf16, #tpu.memory_space<vmem>>, %arg3: memref<128x128xbf16, #tpu.memory_space<vmem>>, %arg4: memref<128x128xbf16, #tpu.memory_space<vmem>>, %arg5: memref<128x128xbf16, #tpu.memory_space<vmem>>, %arg6: memref<128x128xf32, #tpu.memory_space<vmem>>) attributes {dimension_semantics = [#tpu.dimension_semantics<parallel>, #tpu.dimension_semantics<arbitrary>], iteration_bounds = array<i64: 1, 1>, scalar_prefetch = 0 : i64, scratch_operands = 1 : i64, tpu.core_type = #tpu.core_type<tc>, window_params = [{transform_indices = @transform_0, window_bounds = array<i64: 128, 128>}, {transform_indices = @transform_1, window_bounds = array<i64: 128, 128>}, {pipeline_mode = #tpu.pipeline_mode<synchronous>, transform_indices = @transform_2, window_bounds = array<i64: 128, 128>}, {transform_indices = @transform_3, window_bounds = array<i64: 128, 128>}]} {
    %c0_i32 = arith.constant 0 : i32
    %0 = arith.cmpi eq, %arg1, %c0_i32 : i32
    %1 = arith.extui %0 : i1 to i32
    %c0_i32_0 = arith.constant 0 : i32
    %2 = arith.cmpi ne, %1, %c0_i32_0 : i32
    scf.if %2 {
      %cst_10 = arith.constant 0.000000e+00 : f32
      %12 = vector.broadcast %cst_10 : f32 to vector<128x128xf32>
      %c0_11 = arith.constant 0 : index
      %c0_12 = arith.constant 0 : index
      %13 = vector.load %arg6[%c0_11, %c0_12] : memref<128x128xf32, #tpu.memory_space<vmem>>, vector<128x128xf32>
      tpu.vector_store %arg6[%c0_11, %c0_12], %12 {strides = array<i32>} : memref<128x128xf32, #tpu.memory_space<vmem>>, vector<128x128xf32>,
    } else {
    }
    %c0 = arith.constant 0 : index
    %c0_1 = arith.constant 0 : index
    %3 = vector.load %arg6[%c0, %c0_1] : memref<128x128xf32, #tpu.memory_space<vmem>>, vector<128x128xf32>
    %c0_2 = arith.constant 0 : index
    %c0_3 = arith.constant 0 : index
    %4 = vector.load %arg2[%c0_2, %c0_3] : memref<128x128xbf16, #tpu.memory_space<vmem>>, vector<128x128xbf16>
    %c0_4 = arith.constant 0 : index
    %c0_5 = arith.constant 0 : index
    %5 = vector.load %arg3[%c0_4, %c0_5] : memref<128x128xbf16, #tpu.memory_space<vmem>>, vector<128x128xbf16>
    %cst = arith.constant dense<0.000000e+00> : vector<128x128xf32>
    %6 = tpu.matmul %4, %5, %cst {dimension_numbers = #tpu.dot_dimension_numbers<[1], [0], [0], [1], [0, 0, 1, 1], [], []>} : vector<128x128xbf16>, vector<128x128xbf16>, vector<128x128xf32> -> vector<128x128xf32>
    %7 = arith.addf %3, %6 : vector<128x128xf32>
    %c0_6 = arith.constant 0 : index
    %c0_7 = arith.constant 0 : index
    %8 = vector.load %arg6[%c0_6, %c0_7] : memref<128x128xf32, #tpu.memory_space<vmem>>, vector<128x128xf32>
    tpu.vector_store %arg6[%c0_6, %c0_7], %7 {strides = array<i32>} : memref<128x128xf32, #tpu.memory_space<vmem>>, vector<128x128xf32>,
    %c0_i32_8 = arith.constant 0 : i32
    %9 = arith.cmpi eq, %arg1, %c0_i32_8 : i32
    %10 = arith.extui %9 : i1 to i32
    %c0_i32_9 = arith.constant 0 : i32
    %11 = arith.cmpi ne, %10, %c0_i32_9 : i32
    scf.if %11 {
      %c0_10 = arith.constant 0 : index
      %c0_11 = arith.constant 0 : index
      %12 = vector.load %arg6[%c0_10, %c0_11] : memref<128x128xf32, #tpu.memory_space<vmem>>, vector<128x128xf32>
      %cst_12 = arith.constant 0.000000e+00 : f32
      %13 = vector.broadcast %cst_12 : f32 to vector<128x128xf32>
      %14 = arith.maximumf %12, %13 : vector<128x128xf32>
      %15 = arith.truncf %14 : vector<128x128xf32> to vector<128x128xbf16>
      %c0_13 = arith.constant 0 : index
      %c0_14 = arith.constant 0 : index
      %16 = vector.load %arg4[%c0_13, %c0_14] : memref<128x128xbf16, #tpu.memory_space<vmem>>, vector<128x128xbf16>
      %cst_15 = arith.constant dense<0.000000e+00> : vector<128x128xf32>
      %17 = tpu.matmul %15, %16, %cst_15 {dimension_numbers = #tpu.dot_dimension_numbers<[1], [0], [0], [1], [0, 0, 1, 1], [], []>} : vector<128x128xbf16>, vector<128x128xbf16>, vector<128x128xf32> -> vector<128x128xf32>
      %18 = arith.truncf %17 : vector<128x128xf32> to vector<128x128xbf16>
      %c0_16 = arith.constant 0 : index
      %c0_17 = arith.constant 0 : index
      %19 = vector.load %arg5[%c0_16, %c0_17] : memref<128x128xbf16, #tpu.memory_space<vmem>>, vector<128x128xbf16>
      tpu.vector_store %arg5[%c0_16, %c0_17], %18 {strides = array<i32>} : memref<128x128xbf16, #tpu.memory_space<vmem>>, vector<128x128xbf16>,
    } else {
    }
    return
  }
  func.func @transform_0(%arg0: i32, %arg1: i32) -> (i32, i32) {
    %c0_i32 = arith.constant 0 : i32
    return %arg0, %arg1 : i32, i32
  }
  func.func @transform_1(%arg0: i32, %arg1: i32) -> (i32, i32) {
    %c0_i32 = arith.constant 0 : i32
    %c0_i32_0 = arith.constant 0 : i32
    return %arg1, %c0_i32 : i32, i32
  }
  func.func @transform_2(%arg0: i32, %arg1: i32) -> (i32, i32) {
    %c0_i32 = arith.constant 0 : i32
    %c0_i32_0 = arith.constant 0 : i32
    %c0_i32_1 = arith.constant 0 : i32
    return %c0_i32, %c0_i32_0 : i32, i32
  }
  func.func @transform_3(%arg0: i32, %arg1: i32) -> (i32, i32) {
    %c0_i32 = arith.constant 0 : i32
    %c0_i32_0 = arith.constant 0 : i32
    return %arg0, %c0_i32 : i32, i32
  }
}

</mosaic_0001>

<llo_original>
// kernel: manual_gcn_forward.5
$region0: #{manual_gcn_forward.5}
  #allocation0 [shape = 'u32[]', space=smem, size = 0x4, offset = 0x4, fixed_abs, tag = 'smem constant byte address 0x4 - core index']
  #allocation1 [shape = 'u32[144,128]{1,0:T(1,128)}', space=vmem, size = 0x12000, scoped, tag = 'internal scratch']
  #allocation2 [shape = 'f32[128,128]{1,0:T(8,128)}', space=vmem, size = 0x10000, scoped, tag = 'scratch operand']
  %s0 = inlined_call_operand.vmem [shape: bf16[128,128], index: 0, kind: input, shape index: {}]
  %s1 = inlined_call_operand.vmem [shape: bf16[128,128], index: 1, kind: input, shape index: {}]
  %s2 = inlined_call_operand.vmem [shape: f32[128,128], index: 2, kind: output, shape index: {}]
  %s3 = sld [smem:[#allocation0]]
  $region26: #{manual_gcn_forward.5} parent=0
    _
  %s5 = ssub.s32 1, %s3
  %s6 = scalar_select 0, %s5, %s3
  // Predicated region
  $region2: #{manual_gcn_forward.5} parent=0 // pred_check
    _
  $region3: #{manual_gcn_forward.5} parent=0 // pred_check_branch
    %8 = sbr.rel (0) target = $region5
  $region4: #{manual_gcn_forward.5} parent=0 // pred_region
    _
  $region5: #{manual_gcn_forward.5} parent=0 // pred_fallthru
    _
  // Predicated region
  $region6: #{manual_gcn_forward.5} parent=0 // pred_check
    _
  $region7: #{manual_gcn_forward.5} parent=0 // pred_check_branch
    %10 = sbr.rel (0) target = $region9
  $region8: #{manual_gcn_forward.5} parent=0 // pred_region
    _
  $region9: #{manual_gcn_forward.5} parent=0 // pred_fallthru
    _
  %p12 = scmp.eq.s32.totalorder 0, 0
  // Predicated region
  $region10: #{manual_gcn_forward.5} parent=0 // pred_check
    %p13 = pneg %p12
  $region11: #{manual_gcn_forward.5} parent=0 // pred_check_branch
    %15 = sbr.rel (%p13) target = $region13
  $region12: #{manual_gcn_forward.5} parent=0 // pred_region
    %16 = vst [vmem:[#allocation2] sm:$0xff] 0.0
    %17 = vst [vmem:[#allocation2 + $0x8] sm:$0xff] 0.0
    %18 = vst [vmem:[#allocation2 + $0x10] sm:$0xff] 0.0
    %19 = vst [vmem:[#allocation2 + $0x18] sm:$0xff] 0.0
    %20 = vst [vmem:[#allocation2 + $0x20] sm:$0xff] 0.0
    %21 = vst [vmem:[#allocation2 + $0x28] sm:$0xff] 0.0
    %22 = vst [vmem:[#allocation2 + $0x30] sm:$0xff] 0.0
    %23 = vst [vmem:[#allocation2 + $0x38] sm:$0xff] 0.0
    %24 = vst [vmem:[#allocation2 + $0x40] sm:$0xff] 0.0
    %25 = vst [vmem:[#allocation2 + $0x48] sm:$0xff] 0.0
    %26 = vst [vmem:[#allocation2 + $0x50] sm:$0xff] 0.0
    %27 = vst [vmem:[#allocation2 + $0x58] sm:$0xff] 0.0
    %28 = vst [vmem:[#allocation2 + $0x60] sm:$0xff] 0.0
    %29 = vst [vmem:[#allocation2 + $0x68] sm:$0xff] 0.0
    %30 = vst [vmem:[#allocation2 + $0x70] sm:$0xff] 0.0
    %31 = vst [vmem:[#allocation2 + $0x78] sm:$0xff] 0.0
  $region13: #{manual_gcn_forward.5} parent=0 // pred_fallthru
    _
  %v32 = vld [vmem:[#allocation2] sm:$0xff]
  %v33 = vld [vmem:[#allocation2 + $0x8] sm:$0xff]
  %v34 = vld [vmem:[#allocation2 + $0x10] sm:$0xff]
  %v35 = vld [vmem:[#allocation2 + $0x18] sm:$0xff]
  %v36 = vld [vmem:[#allocation2 + $0x20] sm:$0xff]
  %v37 = vld [vmem:[#allocation2 + $0x28] sm:$0xff]
  %v38 = vld [vmem:[#allocation2 + $0x30] sm:$0xff]
  %v39 = vld [vmem:[#allocation2 + $0x38] sm:$0xff]
  %v40 = vld [vmem:[#allocation2 + $0x40] sm:$0xff]
  %v41 = vld [vmem:[#allocation2 + $0x48] sm:$0xff]
  %v42 = vld [vmem:[#allocation2 + $0x50] sm:$0xff]
  %v43 = vld [vmem:[#allocation2 + $0x58] sm:$0xff]
  %v44 = vld [vmem:[#allocation2 + $0x60] sm:$0xff]
  %v45 = vld [vmem:[#allocation2 + $0x68] sm:$0xff]
  %v46 = vld [vmem:[#allocation2 + $0x70] sm:$0xff]
  %v47 = vld [vmem:[#allocation2 + $0x78] sm:$0xff]
  %v48 = vld [vmem:[%s0] sm:$0xf]
  %v49 = vld [vmem:[%s0 + $0x4] sm:$0xf]
  %v50 = vld [vmem:[%s0 + $0x8] sm:$0xf]
  %v51 = vld [vmem:[%s0 + $0xc] sm:$0xf]
  %v52 = vld [vmem:[%s0 + $0x10] sm:$0xf]
  %v53 = vld [vmem:[%s0 + $0x14] sm:$0xf]
  %v54 = vld [vmem:[%s0 + $0x18] sm:$0xf]
  %v55 = vld [vmem:[%s0 + $0x1c] sm:$0xf]
  %v56 = vld [vmem:[%s0 + $0x20] sm:$0xf]
  %v57 = vld [vmem:[%s0 + $0x24] sm:$0xf]
  %v58 = vld [vmem:[%s0 + $0x28] sm:$0xf]
  %v59 = vld [vmem:[%s0 + $0x2c] sm:$0xf]
  %v60 = vld [vmem:[%s0 + $0x30] sm:$0xf]
  %v61 = vld [vmem:[%s0 + $0x34] sm:$0xf]
  %v62 = vld [vmem:[%s0 + $0x38] sm:$0xf]
  %v63 = vld [vmem:[%s0 + $0x3c] sm:$0xf]
  %v64 = vld [vmem:[%s1] sm:$0xf]
  %v65 = vld [vmem:[%s1 + $0x4] sm:$0xf]
  %v66 = vld [vmem:[%s1 + $0x8] sm:$0xf]
  %v67 = vld [vmem:[%s1 + $0xc] sm:$0xf]
  %v68 = vld [vmem:[%s1 + $0x10] sm:$0xf]
  %v69 = vld [vmem:[%s1 + $0x14] sm:$0xf]
  %v70 = vld [vmem:[%s1 + $0x18] sm:$0xf]
  %v71 = vld [vmem:[%s1 + $0x1c] sm:$0xf]
  %v72 = vld [vmem:[%s1 + $0x20] sm:$0xf]
  %v73 = vld [vmem:[%s1 + $0x24] sm:$0xf]
  %v74 = vld [vmem:[%s1 + $0x28] sm:$0xf]
  %v75 = vld [vmem:[%s1 + $0x2c] sm:$0xf]
  %v76 = vld [vmem:[%s1 + $0x30] sm:$0xf]
  %v77 = vld [vmem:[%s1 + $0x34] sm:$0xf]
  %v78 = vld [vmem:[%s1 + $0x38] sm:$0xf]
  %v79 = vld [vmem:[%s1 + $0x3c] sm:$0xf]
  %v96 = vunpack.c.l.b16 %v48
  %v97 = vunpack.c.l.b16 %v49
  %v98 = vunpack.c.l.b16 %v50
  %v99 = vunpack.c.l.b16 %v51
  %v100 = vunpack.c.l.b16 %v52
  %v101 = vunpack.c.l.b16 %v53
  %v102 = vunpack.c.l.b16 %v54
  %v103 = vunpack.c.l.b16 %v55
  %v104 = vunpack.c.l.b16 %v56
  %v105 = vunpack.c.l.b16 %v57
  %v106 = vunpack.c.l.b16 %v58
  %v107 = vunpack.c.l.b16 %v59
  %v108 = vunpack.c.l.b16 %v60
  %v109 = vunpack.c.l.b16 %v61
  %v110 = vunpack.c.l.b16 %v62
  %v111 = vunpack.c.l.b16 %v63
  %v112 = vpack.c.b16 %v97, %v96
  %v113 = vpack.c.b16 %v99, %v98
  %v114 = vpack.c.b16 %v101, %v100
  %v115 = vpack.c.b16 %v103, %v102
  %v116 = vpack.c.b16 %v105, %v104
  %v117 = vpack.c.b16 %v107, %v106
  %v118 = vpack.c.b16 %v109, %v108
  %v119 = vpack.c.b16 %v111, %v110
  %v144 = vunpack.c.l.b16 %v64
  %v145 = vunpack.c.l.b16 %v65
  %v146 = vunpack.c.l.b16 %v66
  %v147 = vunpack.c.l.b16 %v67
  %v148 = vunpack.c.l.b16 %v68
  %v149 = vunpack.c.l.b16 %v69
  %v150 = vunpack.c.l.b16 %v70
  %v151 = vunpack.c.l.b16 %v71
  %v152 = vunpack.c.l.b16 %v72
  %v153 = vunpack.c.l.b16 %v73
  %v154 = vunpack.c.l.b16 %v74
  %v155 = vunpack.c.l.b16 %v75
  %v156 = vunpack.c.l.b16 %v76
  %v157 = vunpack.c.l.b16 %v77
  %v158 = vunpack.c.l.b16 %v78
  %v159 = vunpack.c.l.b16 %v79
  %v160 = vpack.c.b16 %v145, %v144
  %v161 = vpack.c.b16 %v147, %v146
  %v162 = vpack.c.b16 %v149, %v148
  %v163 = vpack.c.b16 %v151, %v150
  %v164 = vpack.c.b16 %v153, %v152
  %v165 = vpack.c.b16 %v155, %v154
  %v166 = vpack.c.b16 %v157, %v156
  %v167 = vpack.c.b16 %v159, %v158
  %176 = vmatprep.subr.bf16.mxu0 0
  %177 = vmatpush1.bf16.msra.mxu0 %v167
  %178 = vmatprep.subr.bf16.mxu0 0
  %179 = vmatpush1.bf16.msra.mxu0 %v166
  %180 = vmatprep.subr.bf16.mxu0 0
  %181 = vmatpush1.bf16.msra.mxu0 %v165
  %182 = vmatprep.subr.bf16.mxu0 0
  %183 = vmatpush1.bf16.msra.mxu0 %v164
  %184 = vmatprep.subr.bf16.mxu0 0
  %185 = vmatpush1.bf16.msra.mxu0 %v163
  %186 = vmatprep.subr.bf16.mxu0 0
  %187 = vmatpush1.bf16.msra.mxu0 %v162
  %188 = vmatprep.subr.bf16.mxu0 0
  %189 = vmatpush1.bf16.msra.mxu0 %v161
  %190 = vmatprep.subr.bf16.mxu0 0
  %191 = vmatpush1.bf16.msra.mxu0 %v160
  %192 = vmatprep.subr.bf16.mxu0 0
  %193 = vmatpush2.bf16.msra.mxu0 0
  %194 = vmatprep.subr.bf16.mxu0 0
  %195 = vmatpush2.bf16.msra.mxu0 0
  %196 = vmatprep.subr.bf16.mxu0 0
  %197 = vmatpush2.bf16.msra.mxu0 0
  %198 = vmatprep.subr.bf16.mxu0 0
  %199 = vmatpush2.bf16.msra.mxu0 0
  %200 = vmatprep.subr.bf16.mxu0 0
  %201 = vmatpush2.bf16.msra.mxu0 0
  %202 = vmatprep.subr.bf16.mxu0 0
  %203 = vmatpush2.bf16.msra.mxu0 0
  %204 = vmatprep.subr.bf16.mxu0 0
  %205 = vmatpush2.bf16.msra.mxu0 0
  %206 = vmatprep.subr.bf16.mxu0 0
  %207 = vmatpush2.bf16.msra.mxu0 0
  %208 = vmatprep.mubr.bf16.mxu0 0
  %209 = vmatmul.mubr.bf16.gmra.mxu0 %v112
  %v210 = vpop.f32.mrf.mxu0
  %v211 = vadd.f32 0.0, %v210
  %v212 = vpop.f32.mrf.mxu0
  %v213 = vpop.f32.mrf.mxu0
  %v214 = vadd.f32 0.0, %v213
  %v215 = vpop.f32.mrf.mxu0
  %216 = vmatprep.mubr.bf16.mxu0 0
  %217 = vmatmul.mubr.bf16.gmra.mxu0 %v113
  %v218 = vpop.f32.mrf.mxu0
  %v219 = vadd.f32 0.0, %v218
  %v220 = vpop.f32.mrf.mxu0
  %v221 = vpop.f32.mrf.mxu0
  %v222 = vadd.f32 0.0, %v221
  %v223 = vpop.f32.mrf.mxu0
  %224 = vmatprep.mubr.bf16.mxu0 0
  %225 = vmatmul.mubr.bf16.gmra.mxu0 %v114
  %v226 = vpop.f32.mrf.mxu0
  %v227 = vadd.f32 0.0, %v226
  %v228 = vpop.f32.mrf.mxu0
  %v229 = vpop.f32.mrf.mxu0
  %v230 = vadd.f32 0.0, %v229
  %v231 = vpop.f32.mrf.mxu0
  %232 = vmatprep.mubr.bf16.mxu0 0
  %233 = vmatmul.mubr.bf16.gmra.mxu0 %v115
  %v234 = vpop.f32.mrf.mxu0
  %v235 = vadd.f32 0.0, %v234
  %v236 = vpop.f32.mrf.mxu0
  %v237 = vpop.f32.mrf.mxu0
  %v238 = vadd.f32 0.0, %v237
  %v239 = vpop.f32.mrf.mxu0
  %240 = vmatprep.mubr.bf16.mxu0 0
  %241 = vmatmul.mubr.bf16.gmra.mxu0 %v116
  %v242 = vpop.f32.mrf.mxu0
  %v243 = vadd.f32 0.0, %v242
  %v244 = vpop.f32.mrf.mxu0
  %v245 = vpop.f32.mrf.mxu0
  %v246 = vadd.f32 0.0, %v245
  %v247 = vpop.f32.mrf.mxu0
  %248 = vmatprep.mubr.bf16.mxu0 0
  %249 = vmatmul.mubr.bf16.gmra.mxu0 %v117
  %v250 = vpop.f32.mrf.mxu0
  %v251 = vadd.f32 0.0, %v250
  %v252 = vpop.f32.mrf.mxu0
  %v253 = vpop.f32.mrf.mxu0
  %v254 = vadd.f32 0.0, %v253
  %v255 = vpop.f32.mrf.mxu0
  %256 = vmatprep.mubr.bf16.mxu0 0
  %257 = vmatmul.mubr.bf16.gmra.mxu0 %v118
  %v258 = vpop.f32.mrf.mxu0
  %v259 = vadd.f32 0.0, %v258
  %v260 = vpop.f32.mrf.mxu0
  %v261 = vpop.f32.mrf.mxu0
  %v262 = vadd.f32 0.0, %v261
  %v263 = vpop.f32.mrf.mxu0
  %264 = vmatprep.mubr.bf16.mxu0 0
  %265 = vmatmul.mubr.bf16.gmra.mxu0 %v119
  %v266 = vpop.f32.mrf.mxu0
  %v267 = vadd.f32 0.0, %v266
  %v268 = vpop.f32.mrf.mxu0
  %v269 = vpop.f32.mrf.mxu0
  %v270 = vadd.f32 0.0, %v269
  %v271 = vpop.f32.mrf.mxu0
  %272 = vdwg.mxu0
  %v273 = vadd.f32 %v32, %v211
  %v274 = vadd.f32 %v33, %v214
  %v275 = vadd.f32 %v34, %v219
  %v276 = vadd.f32 %v35, %v222
  %v277 = vadd.f32 %v36, %v227
  %v278 = vadd.f32 %v37, %v230
  %v279 = vadd.f32 %v38, %v235
  %v280 = vadd.f32 %v39, %v238
  %v281 = vadd.f32 %v40, %v243
  %v282 = vadd.f32 %v41, %v246
  %v283 = vadd.f32 %v42, %v251
  %v284 = vadd.f32 %v43, %v254
  %v285 = vadd.f32 %v44, %v259
  %v286 = vadd.f32 %v45, %v262
  %v287 = vadd.f32 %v46, %v267
  %v288 = vadd.f32 %v47, %v270
  %289 = vst [vmem:[#allocation2] sm:$0xff] %v273
  %290 = vst [vmem:[#allocation2 + $0x8] sm:$0xff] %v274
  %291 = vst [vmem:[#allocation2 + $0x10] sm:$0xff] %v275
  %292 = vst [vmem:[#allocation2 + $0x18] sm:$0xff] %v276
  %293 = vst [vmem:[#allocation2 + $0x20] sm:$0xff] %v277
  %294 = vst [vmem:[#allocation2 + $0x28] sm:$0xff] %v278
  %295 = vst [vmem:[#allocation2 + $0x30] sm:$0xff] %v279
  %296 = vst [vmem:[#allocation2 + $0x38] sm:$0xff] %v280
  %297 = vst [vmem:[#allocation2 + $0x40] sm:$0xff] %v281
  %298 = vst [vmem:[#allocation2 + $0x48] sm:$0xff] %v282
  %299 = vst [vmem:[#allocation2 + $0x50] sm:$0xff] %v283
  %300 = vst [vmem:[#allocation2 + $0x58] sm:$0xff] %v284
  %301 = vst [vmem:[#allocation2 + $0x60] sm:$0xff] %v285
  %302 = vst [vmem:[#allocation2 + $0x68] sm:$0xff] %v286
  %303 = vst [vmem:[#allocation2 + $0x70] sm:$0xff] %v287
  %304 = vst [vmem:[#allocation2 + $0x78] sm:$0xff] %v288
  // Predicated region
  $region14: #{manual_gcn_forward.5} parent=0 // pred_check
    %p305 = pneg %p12
  $region15: #{manual_gcn_forward.5} parent=0 // pred_check_branch
    %307 = sbr.rel (%p305) target = $region17
  $region16: #{manual_gcn_forward.5} parent=0 // pred_region
    %v308 = vld [vmem:[#allocation2] sm:$0xff]
    %v309 = vld [vmem:[#allocation2 + $0x8] sm:$0xff]
    %v310 = vld [vmem:[#allocation2 + $0x10] sm:$0xff]
    %v311 = vld [vmem:[#allocation2 + $0x18] sm:$0xff]
    %v312 = vld [vmem:[#allocation2 + $0x20] sm:$0xff]
    %v313 = vld [vmem:[#allocation2 + $0x28] sm:$0xff]
    %v314 = vld [vmem:[#allocation2 + $0x30] sm:$0xff]
    %v315 = vld [vmem:[#allocation2 + $0x38] sm:$0xff]
    %v316 = vld [vmem:[#allocation2 + $0x40] sm:$0xff]
    %v317 = vld [vmem:[#allocation2 + $0x48] sm:$0xff]
    %v318 = vld [vmem:[#allocation2 + $0x50] sm:$0xff]
    %v319 = vld [vmem:[#allocation2 + $0x58] sm:$0xff]
    %v320 = vld [vmem:[#allocation2 + $0x60] sm:$0xff]
    %v321 = vld [vmem:[#allocation2 + $0x68] sm:$0xff]
    %v322 = vld [vmem:[#allocation2 + $0x70] sm:$0xff]
    %v323 = vld [vmem:[#allocation2 + $0x78] sm:$0xff]
    %v324 = vlaneseq
    %v325 = vand.u32 %v324, 127
    %vm326 = vcmp.lt.s32.totalorder %v325, 8
    %v327 = vsel %vm326, %v308, -1e+30
    %v328 = vsel %vm326, %v309, -1e+30
    %v329 = vsel %vm326, %v310, -1e+30
    %v330 = vsel %vm326, %v311, -1e+30
    %v331 = vsel %vm326, %v312, -1e+30
    %v332 = vsel %vm326, %v313, -1e+30
    %v333 = vsel %vm326, %v314, -1e+30
    %v334 = vsel %vm326, %v315, -1e+30
    %v335 = vsel %vm326, %v316, -1e+30
    %v336 = vsel %vm326, %v317, -1e+30
    %v337 = vsel %vm326, %v318, -1e+30
    %v338 = vsel %vm326, %v319, -1e+30
    %v339 = vsel %vm326, %v320, -1e+30
    %v340 = vsel %vm326, %v321, -1e+30
    %v341 = vsel %vm326, %v322, -1e+30
    %v342 = vsel %vm326, %v323, -1e+30
    %343 = vmax.xlane.f32.xlu0 %v327
    %v344 = vpop.xlane.xlu0 %343
    %345 = vmax.xlane.f32.xlu0 %v328
    %v346 = vpop.xlane.xlu0 %345
    %347 = vmax.xlane.f32.xlu0 %v329
    %v348 = vpop.xlane.xlu0 %347
    %349 = vmax.xlane.f32.xlu0 %v330
    %v350 = vpop.xlane.xlu0 %349
    %351 = vmax.xlane.f32.xlu0 %v331
    %v352 = vpop.xlane.xlu0 %351
    %353 = vmax.xlane.f32.xlu0 %v332
    %v354 = vpop.xlane.xlu0 %353
    %355 = vmax.xlane.f32.xlu0 %v333
    %v356 = vpop.xlane.xlu0 %355
    %357 = vmax.xlane.f32.xlu0 %v334
    %v358 = vpop.xlane.xlu0 %357
    %359 = vmax.xlane.f32.xlu0 %v335
    %v360 = vpop.xlane.xlu0 %359
    %361 = vmax.xlane.f32.xlu0 %v336
    %v362 = vpop.xlane.xlu0 %361
    %363 = vmax.xlane.f32.xlu0 %v337
    %v364 = vpop.xlane.xlu0 %363
    %365 = vmax.xlane.f32.xlu0 %v338
    %v366 = vpop.xlane.xlu0 %365
    %367 = vmax.xlane.f32.xlu0 %v339
    %v368 = vpop.xlane.xlu0 %367
    %369 = vmax.xlane.f32.xlu0 %v340
    %v370 = vpop.xlane.xlu0 %369
    %371 = vmax.xlane.f32.xlu0 %v341
    %v372 = vpop.xlane.xlu0 %371
    %373 = vmax.xlane.f32.xlu0 %v342
    %v374 = vpop.xlane.xlu0 %373
    %v375 = vsub.f32 %v327, %v344
    %v376 = vsub.f32 %v328, %v346
    %v377 = vsub.f32 %v329, %v348
    %v378 = vsub.f32 %v330, %v350
    %v379 = vsub.f32 %v331, %v352
    %v380 = vsub.f32 %v332, %v354
    %v381 = vsub.f32 %v333, %v356
    %v382 = vsub.f32 %v334, %v358
    %v383 = vsub.f32 %v335, %v360
    %v384 = vsub.f32 %v336, %v362
    %v385 = vsub.f32 %v337, %v364
    %v386 = vsub.f32 %v338, %v366
    %v387 = vsub.f32 %v339, %v368
    %v388 = vsub.f32 %v340, %v370
    %v389 = vsub.f32 %v341, %v372
    %v390 = vsub.f32 %v342, %v374
    %v391 = vmul.f32 %v375, 1.442695
    %v392 = vpow.pop %v391
    %v393 = vmul.f32 %v376, 1.442695
    %v394 = vpow.pop %v393
    %v395 = vmul.f32 %v377, 1.442695
    %v396 = vpow.pop %v395
    %v397 = vmul.f32 %v378, 1.442695
    %v398 = vpow.pop %v397
    %v399 = vmul.f32 %v379, 1.442695
    %v400 = vpow.pop %v399
    %v401 = vmul.f32 %v380, 1.442695
    %v402 = vpow.pop %v401
    %v403 = vmul.f32 %v381, 1.442695
    %v404 = vpow.pop %v403
    %v405 = vmul.f32 %v382, 1.442695
    %v406 = vpow.pop %v405
    %v407 = vmul.f32 %v383, 1.442695
    %v408 = vpow.pop %v407
    %v409 = vmul.f32 %v384, 1.442695
    %v410 = vpow.pop %v409
    %v411 = vmul.f32 %v385, 1.442695
    %v412 = vpow.pop %v411
    %v413 = vmul.f32 %v386, 1.442695
    %v414 = vpow.pop %v413
    %v415 = vmul.f32 %v387, 1.442695
    %v416 = vpow.pop %v415
    %v417 = vmul.f32 %v388, 1.442695
    %v418 = vpow.pop %v417
    %v419 = vmul.f32 %v389, 1.442695
    %v420 = vpow.pop %v419
    %v421 = vmul.f32 %v390, 1.442695
    %v422 = vpow.pop %v421
    %423 = vadd.xlane.f32.xlu0 %v392
    %v424 = vpop.xlane.xlu0 %423
    %425 = vadd.xlane.f32.xlu0 %v394
    %v426 = vpop.xlane.xlu0 %425
    %427 = vadd.xlane.f32.xlu0 %v396
    %v428 = vpop.xlane.xlu0 %427
    %429 = vadd.xlane.f32.xlu0 %v398
    %v430 = vpop.xlane.xlu0 %429
    %431 = vadd.xlane.f32.xlu0 %v400
    %v432 = vpop.xlane.xlu0 %431
    %433 = vadd.xlane.f32.xlu0 %v402
    %v434 = vpop.xlane.xlu0 %433
    %435 = vadd.xlane.f32.xlu0 %v404
    %v436 = vpop.xlane.xlu0 %435
    %437 = vadd.xlane.f32.xlu0 %v406
    %v438 = vpop.xlane.xlu0 %437
    %439 = vadd.xlane.f32.xlu0 %v408
    %v440 = vpop.xlane.xlu0 %439
    %441 = vadd.xlane.f32.xlu0 %v410
    %v442 = vpop.xlane.xlu0 %441
    %443 = vadd.xlane.f32.xlu0 %v412
    %v444 = vpop.xlane.xlu0 %443
    %445 = vadd.xlane.f32.xlu0 %v414
    %v446 = vpop.xlane.xlu0 %445
    %447 = vadd.xlane.f32.xlu0 %v416
    %v448 = vpop.xlane.xlu0 %447
    %449 = vadd.xlane.f32.xlu0 %v418
    %v450 = vpop.xlane.xlu0 %449
    %451 = vadd.xlane.f32.xlu0 %v420
    %v452 = vpop.xlane.xlu0 %451
    %453 = vadd.xlane.f32.xlu0 %v422
    %v454 = vpop.xlane.xlu0 %453
    %v455 = vlog2.pop %v424
    %v456 = vmul.f32 %v455, 0.6931472
    %v457 = vlog2.pop %v426
    %v458 = vmul.f32 %v457, 0.6931472
    %v459 = vlog2.pop %v428
    %v460 = vmul.f32 %v459, 0.6931472
    %v461 = vlog2.pop %v430
    %v462 = vmul.f32 %v461, 0.6931472
    %v463 = vlog2.pop %v432
    %v464 = vmul.f32 %v463, 0.6931472
    %v465 = vlog2.pop %v434
    %v466 = vmul.f32 %v465, 0.6931472
    %v467 = vlog2.pop %v436
    %v468 = vmul.f32 %v467, 0.6931472
    %v469 = vlog2.pop %v438
    %v470 = vmul.f32 %v469, 0.6931472
    %v471 = vlog2.pop %v440
    %v472 = vmul.f32 %v471, 0.6931472
    %v473 = vlog2.pop %v442
    %v474 = vmul.f32 %v473, 0.6931472
    %v475 = vlog2.pop %v444
    %v476 = vmul.f32 %v475, 0.6931472
    %v477 = vlog2.pop %v446
    %v478 = vmul.f32 %v477, 0.6931472
    %v479 = vlog2.pop %v448
    %v480 = vmul.f32 %v479, 0.6931472
    %v481 = vlog2.pop %v450
    %v482 = vmul.f32 %v481, 0.6931472
    %v483 = vlog2.pop %v452
    %v484 = vmul.f32 %v483, 0.6931472
    %v485 = vlog2.pop %v454
    %v486 = vmul.f32 %v485, 0.6931472
    %v487 = vsub.f32 %v375, %v456
    %v488 = vsub.f32 %v376, %v458
    %v489 = vsub.f32 %v377, %v460
    %v490 = vsub.f32 %v378, %v462
    %v491 = vsub.f32 %v379, %v464
    %v492 = vsub.f32 %v380, %v466
    %v493 = vsub.f32 %v381, %v468
    %v494 = vsub.f32 %v382, %v470
    %v495 = vsub.f32 %v383, %v472
    %v496 = vsub.f32 %v384, %v474
    %v497 = vsub.f32 %v385, %v476
    %v498 = vsub.f32 %v386, %v478
    %v499 = vsub.f32 %v387, %v480
    %v500 = vsub.f32 %v388, %v482
    %v501 = vsub.f32 %v389, %v484
    %v502 = vsub.f32 %v390, %v486
    %503 = vst [vmem:[%s2] sm:$0xff] %v487
    %504 = vst [vmem:[%s2 + $0x8] sm:$0xff] %v488
    %505 = vst [vmem:[%s2 + $0x10] sm:$0xff] %v489
    %506 = vst [vmem:[%s2 + $0x18] sm:$0xff] %v490
    %507 = vst [vmem:[%s2 + $0x20] sm:$0xff] %v491
    %508 = vst [vmem:[%s2 + $0x28] sm:$0xff] %v492
    %509 = vst [vmem:[%s2 + $0x30] sm:$0xff] %v493
    %510 = vst [vmem:[%s2 + $0x38] sm:$0xff] %v494
    %511 = vst [vmem:[%s2 + $0x40] sm:$0xff] %v495
    %512 = vst [vmem:[%s2 + $0x48] sm:$0xff] %v496
    %513 = vst [vmem:[%s2 + $0x50] sm:$0xff] %v497
    %514 = vst [vmem:[%s2 + $0x58] sm:$0xff] %v498
    %515 = vst [vmem:[%s2 + $0x60] sm:$0xff] %v499
    %516 = vst [vmem:[%s2 + $0x68] sm:$0xff] %v500
    %517 = vst [vmem:[%s2 + $0x70] sm:$0xff] %v501
    %518 = vst [vmem:[%s2 + $0x78] sm:$0xff] %v502
  $region17: #{manual_gcn_forward.5} parent=0 // pred_fallthru
    _
  // Predicated region
  $region18: #{manual_gcn_forward.5} parent=0 // pred_check
    _
  $region19: #{manual_gcn_forward.5} parent=0 // pred_check_branch
    %520 = sbr.rel (0) target = $region21
  $region20: #{manual_gcn_forward.5} parent=0 // pred_region
    _
  $region21: #{manual_gcn_forward.5} parent=0 // pred_fallthru
    _
  // Predicated region
  $region22: #{manual_gcn_forward.5} parent=0 // pred_check
    _
  $region23: #{manual_gcn_forward.5} parent=0 // pred_check_branch
    %522 = sbr.rel (0) target = $region25
  $region24: #{manual_gcn_forward.5} parent=0 // pred_region
    _
  $region25: #{manual_gcn_forward.5} parent=0 // pred_fallthru
    _

// kernel: manual_gcn_forward.3
$region0: #{manual_gcn_forward.3}
  #allocation0 [shape = 'u32[]', space=smem, size = 0x4, offset = 0x4, fixed_abs, tag = 'smem constant byte address 0x4 - core index']
  #allocation1 [shape = 'u32[144,128]{1,0:T(1,128)}', space=vmem, size = 0x12000, scoped, tag = 'internal scratch']
  %s0 = inlined_call_operand.vmem [shape: bf16[128,128], index: 0, kind: input, shape index: {}]
  %s1 = inlined_call_operand.vmem [shape: bf16[128,128], index: 1, kind: input, shape index: {}]
  %s2 = inlined_call_operand.vmem [shape: bf16[128,128], index: 2, kind: output, shape index: {}]
  %s3 = sld [smem:[#allocation0]]
  $region18: #{manual_gcn_forward.3} parent=0
    _
  %s5 = ssub.s32 1, %s3
  %s6 = scalar_select 0, %s5, %s3
  // Predicated region
  $region2: #{manual_gcn_forward.3} parent=0 // pred_check
    _
  $region3: #{manual_gcn_forward.3} parent=0 // pred_check_branch
    %8 = sbr.rel (0) target = $region5
  $region4: #{manual_gcn_forward.3} parent=0 // pred_region
    _
  $region5: #{manual_gcn_forward.3} parent=0 // pred_fallthru
    _
  // Predicated region
  $region6: #{manual_gcn_forward.3} parent=0 // pred_check
    _
  $region7: #{manual_gcn_forward.3} parent=0 // pred_check_branch
    %10 = sbr.rel (0) target = $region9
  $region8: #{manual_gcn_forward.3} parent=0 // pred_region
    _
  $region9: #{manual_gcn_forward.3} parent=0 // pred_fallthru
    _
  %v12 = vld [vmem:[%s0] sm:$0xf]
  %v13 = vld [vmem:[%s0 + $0x4] sm:$0xf]
  %v14 = vld [vmem:[%s0 + $0x8] sm:$0xf]
  %v15 = vld [vmem:[%s0 + $0xc] sm:$0xf]
  %v16 = vld [vmem:[%s0 + $0x10] sm:$0xf]
  %v17 = vld [vmem:[%s0 + $0x14] sm:$0xf]
  %v18 = vld [vmem:[%s0 + $0x18] sm:$0xf]
  %v19 = vld [vmem:[%s0 + $0x1c] sm:$0xf]
  %v20 = vld [vmem:[%s0 + $0x20] sm:$0xf]
  %v21 = vld [vmem:[%s0 + $0x24] sm:$0xf]
  %v22 = vld [vmem:[%s0 + $0x28] sm:$0xf]
  %v23 = vld [vmem:[%s0 + $0x2c] sm:$0xf]
  %v24 = vld [vmem:[%s0 + $0x30] sm:$0xf]
  %v25 = vld [vmem:[%s0 + $0x34] sm:$0xf]
  %v26 = vld [vmem:[%s0 + $0x38] sm:$0xf]
  %v27 = vld [vmem:[%s0 + $0x3c] sm:$0xf]
  %v28 = vld [vmem:[%s1] sm:$0xf]
  %v29 = vld [vmem:[%s1 + $0x4] sm:$0xf]
  %v30 = vld [vmem:[%s1 + $0x8] sm:$0xf]
  %v31 = vld [vmem:[%s1 + $0xc] sm:$0xf]
  %v32 = vld [vmem:[%s1 + $0x10] sm:$0xf]
  %v33 = vld [vmem:[%s1 + $0x14] sm:$0xf]
  %v34 = vld [vmem:[%s1 + $0x18] sm:$0xf]
  %v35 = vld [vmem:[%s1 + $0x1c] sm:$0xf]
  %v36 = vld [vmem:[%s1 + $0x20] sm:$0xf]
  %v37 = vld [vmem:[%s1 + $0x24] sm:$0xf]
  %v38 = vld [vmem:[%s1 + $0x28] sm:$0xf]
  %v39 = vld [vmem:[%s1 + $0x2c] sm:$0xf]
  %v40 = vld [vmem:[%s1 + $0x30] sm:$0xf]
  %v41 = vld [vmem:[%s1 + $0x34] sm:$0xf]
  %v42 = vld [vmem:[%s1 + $0x38] sm:$0xf]
  %v43 = vld [vmem:[%s1 + $0x3c] sm:$0xf]
  %v60 = vunpack.c.l.b16 %v12
  %v61 = vunpack.c.l.b16 %v13
  %v62 = vunpack.c.l.b16 %v14
  %v63 = vunpack.c.l.b16 %v15
  %v64 = vunpack.c.l.b16 %v16
  %v65 = vunpack.c.l.b16 %v17
  %v66 = vunpack.c.l.b16 %v18
  %v67 = vunpack.c.l.b16 %v19
  %v68 = vunpack.c.l.b16 %v20
  %v69 = vunpack.c.l.b16 %v21
  %v70 = vunpack.c.l.b16 %v22
  %v71 = vunpack.c.l.b16 %v23
  %v72 = vunpack.c.l.b16 %v24
  %v73 = vunpack.c.l.b16 %v25
  %v74 = vunpack.c.l.b16 %v26
  %v75 = vunpack.c.l.b16 %v27
  %v76 = vpack.c.b16 %v61, %v60
  %v77 = vpack.c.b16 %v63, %v62
  %v78 = vpack.c.b16 %v65, %v64
  %v79 = vpack.c.b16 %v67, %v66
  %v80 = vpack.c.b16 %v69, %v68
  %v81 = vpack.c.b16 %v71, %v70
  %v82 = vpack.c.b16 %v73, %v72
  %v83 = vpack.c.b16 %v75, %v74
  %v108 = vunpack.c.l.b16 %v28
  %v109 = vunpack.c.l.b16 %v29
  %v110 = vunpack.c.l.b16 %v30
  %v111 = vunpack.c.l.b16 %v31
  %v112 = vunpack.c.l.b16 %v32
  %v113 = vunpack.c.l.b16 %v33
  %v114 = vunpack.c.l.b16 %v34
  %v115 = vunpack.c.l.b16 %v35
  %v116 = vunpack.c.l.b16 %v36
  %v117 = vunpack.c.l.b16 %v37
  %v118 = vunpack.c.l.b16 %v38
  %v119 = vunpack.c.l.b16 %v39
  %v120 = vunpack.c.l.b16 %v40
  %v121 = vunpack.c.l.b16 %v41
  %v122 = vunpack.c.l.b16 %v42
  %v123 = vunpack.c.l.b16 %v43
  %v124 = vpack.c.b16 %v109, %v108
  %v125 = vpack.c.b16 %v111, %v110
  %v126 = vpack.c.b16 %v113, %v112
  %v127 = vpack.c.b16 %v115, %v114
  %v128 = vpack.c.b16 %v117, %v116
  %v129 = vpack.c.b16 %v119, %v118
  %v130 = vpack.c.b16 %v121, %v120
  %v131 = vpack.c.b16 %v123, %v122
  %140 = vmatprep.subr.bf16.mxu0 0
  %141 = vmatpush1.bf16.msra.mxu0 %v131
  %142 = vmatprep.subr.bf16.mxu0 0
  %143 = vmatpush1.bf16.msra.mxu0 %v130
  %144 = vmatprep.subr.bf16.mxu0 0
  %145 = vmatpush1.bf16.msra.mxu0 %v129
  %146 = vmatprep.subr.bf16.mxu0 0
  %147 = vmatpush1.bf16.msra.mxu0 %v128
  %148 = vmatprep.subr.bf16.mxu0 0
  %149 = vmatpush1.bf16.msra.mxu0 %v127
  %150 = vmatprep.subr.bf16.mxu0 0
  %151 = vmatpush1.bf16.msra.mxu0 %v126
  %152 = vmatprep.subr.bf16.mxu0 0
  %153 = vmatpush1.bf16.msra.mxu0 %v125
  %154 = vmatprep.subr.bf16.mxu0 0
  %155 = vmatpush1.bf16.msra.mxu0 %v124
  %156 = vmatprep.subr.bf16.mxu0 0
  %157 = vmatpush2.bf16.msra.mxu0 0
  %158 = vmatprep.subr.bf16.mxu0 0
  %159 = vmatpush2.bf16.msra.mxu0 0
  %160 = vmatprep.subr.bf16.mxu0 0
  %161 = vmatpush2.bf16.msra.mxu0 0
  %162 = vmatprep.subr.bf16.mxu0 0
  %163 = vmatpush2.bf16.msra.mxu0 0
  %164 = vmatprep.subr.bf16.mxu0 0
  %165 = vmatpush2.bf16.msra.mxu0 0
  %166 = vmatprep.subr.bf16.mxu0 0
  %167 = vmatpush2.bf16.msra.mxu0 0
  %168 = vmatprep.subr.bf16.mxu0 0
  %169 = vmatpush2.bf16.msra.mxu0 0
  %170 = vmatprep.subr.bf16.mxu0 0
  %171 = vmatpush2.bf16.msra.mxu0 0
  %172 = vmatprep.mubr.bf16.mxu0 0
  %173 = vmatmul.mubr.bf16.gmra.mxu0 %v76
  %v174 = vpop.f32.mrf.mxu0
  %v175 = vadd.f32 0.0, %v174
  %v176 = vpop.f32.mrf.mxu0
  %v177 = vpop.f32.mrf.mxu0
  %v178 = vadd.f32 0.0, %v177
  %v179 = vpop.f32.mrf.mxu0
  %180 = vmatprep.mubr.bf16.mxu0 0
  %181 = vmatmul.mubr.bf16.gmra.mxu0 %v77
  %v182 = vpop.f32.mrf.mxu0
  %v183 = vadd.f32 0.0, %v182
  %v184 = vpop.f32.mrf.mxu0
  %v185 = vpop.f32.mrf.mxu0
  %v186 = vadd.f32 0.0, %v185
  %v187 = vpop.f32.mrf.mxu0
  %188 = vmatprep.mubr.bf16.mxu0 0
  %189 = vmatmul.mubr.bf16.gmra.mxu0 %v78
  %v190 = vpop.f32.mrf.mxu0
  %v191 = vadd.f32 0.0, %v190
  %v192 = vpop.f32.mrf.mxu0
  %v193 = vpop.f32.mrf.mxu0
  %v194 = vadd.f32 0.0, %v193
  %v195 = vpop.f32.mrf.mxu0
  %196 = vmatprep.mubr.bf16.mxu0 0
  %197 = vmatmul.mubr.bf16.gmra.mxu0 %v79
  %v198 = vpop.f32.mrf.mxu0
  %v199 = vadd.f32 0.0, %v198
  %v200 = vpop.f32.mrf.mxu0
  %v201 = vpop.f32.mrf.mxu0
  %v202 = vadd.f32 0.0, %v201
  %v203 = vpop.f32.mrf.mxu0
  %204 = vmatprep.mubr.bf16.mxu0 0
  %205 = vmatmul.mubr.bf16.gmra.mxu0 %v80
  %v206 = vpop.f32.mrf.mxu0
  %v207 = vadd.f32 0.0, %v206
  %v208 = vpop.f32.mrf.mxu0
  %v209 = vpop.f32.mrf.mxu0
  %v210 = vadd.f32 0.0, %v209
  %v211 = vpop.f32.mrf.mxu0
  %212 = vmatprep.mubr.bf16.mxu0 0
  %213 = vmatmul.mubr.bf16.gmra.mxu0 %v81
  %v214 = vpop.f32.mrf.mxu0
  %v215 = vadd.f32 0.0, %v214
  %v216 = vpop.f32.mrf.mxu0
  %v217 = vpop.f32.mrf.mxu0
  %v218 = vadd.f32 0.0, %v217
  %v219 = vpop.f32.mrf.mxu0
  %220 = vmatprep.mubr.bf16.mxu0 0
  %221 = vmatmul.mubr.bf16.gmra.mxu0 %v82
  %v222 = vpop.f32.mrf.mxu0
  %v223 = vadd.f32 0.0, %v222
  %v224 = vpop.f32.mrf.mxu0
  %v225 = vpop.f32.mrf.mxu0
  %v226 = vadd.f32 0.0, %v225
  %v227 = vpop.f32.mrf.mxu0
  %228 = vmatprep.mubr.bf16.mxu0 0
  %229 = vmatmul.mubr.bf16.gmra.mxu0 %v83
  %v230 = vpop.f32.mrf.mxu0
  %v231 = vadd.f32 0.0, %v230
  %v232 = vpop.f32.mrf.mxu0
  %v233 = vpop.f32.mrf.mxu0
  %v234 = vadd.f32 0.0, %v233
  %v235 = vpop.f32.mrf.mxu0
  %236 = vdwg.mxu0
  %v237 = vpack.c.bf16 %v178, %v175
  %v238 = vpack.c.bf16 %v186, %v183
  %v239 = vpack.c.bf16 %v194, %v191
  %v240 = vpack.c.bf16 %v202, %v199
  %v241 = vpack.c.bf16 %v210, %v207
  %v242 = vpack.c.bf16 %v218, %v215
  %v243 = vpack.c.bf16 %v226, %v223
  %v244 = vpack.c.bf16 %v234, %v231
  %v253 = vunpack.c.l.b16 %v237
  %v254 = vunpack.c.h.b16 %v237
  %v255 = vunpack.c.l.b16 %v238
  %v256 = vunpack.c.h.b16 %v238
  %v257 = vunpack.c.l.b16 %v239
  %v258 = vunpack.c.h.b16 %v239
  %v259 = vunpack.c.l.b16 %v240
  %v260 = vunpack.c.h.b16 %v240
  %v261 = vunpack.c.l.b16 %v241
  %v262 = vunpack.c.h.b16 %v241
  %v263 = vunpack.c.l.b16 %v242
  %v264 = vunpack.c.h.b16 %v242
  %v265 = vunpack.c.l.b16 %v243
  %v266 = vunpack.c.h.b16 %v243
  %v267 = vunpack.c.l.b16 %v244
  %v268 = vunpack.c.h.b16 %v244
  %v269 = vpack.c.b16 %v253, %v253
  %v270 = vpack.c.b16 %v254, %v254
  %v271 = vpack.c.b16 %v255, %v255
  %v272 = vpack.c.b16 %v256, %v256
  %v273 = vpack.c.b16 %v257, %v257
  %v274 = vpack.c.b16 %v258, %v258
  %v275 = vpack.c.b16 %v259, %v259
  %v276 = vpack.c.b16 %v260, %v260
  %v277 = vpack.c.b16 %v261, %v261
  %v278 = vpack.c.b16 %v262, %v262
  %v279 = vpack.c.b16 %v263, %v263
  %v280 = vpack.c.b16 %v264, %v264
  %v281 = vpack.c.b16 %v265, %v265
  %v282 = vpack.c.b16 %v266, %v266
  %v283 = vpack.c.b16 %v267, %v267
  %v284 = vpack.c.b16 %v268, %v268
  %301 = vst [vmem:[%s2] sm:$0xf] %v269
  %302 = vst [vmem:[%s2 + $0x4] sm:$0xf] %v270
  %303 = vst [vmem:[%s2 + $0x8] sm:$0xf] %v271
  %304 = vst [vmem:[%s2 + $0xc] sm:$0xf] %v272
  %305 = vst [vmem:[%s2 + $0x10] sm:$0xf] %v273
  %306 = vst [vmem:[%s2 + $0x14] sm:$0xf] %v274
  %307 = vst [vmem:[%s2 + $0x18] sm:$0xf] %v275
  %308 = vst [vmem:[%s2 + $0x1c] sm:$0xf] %v276
  %309 = vst [vmem:[%s2 + $0x20] sm:$0xf] %v277
  %310 = vst [vmem:[%s2 + $0x24] sm:$0xf] %v278
  %311 = vst [vmem:[%s2 + $0x28] sm:$0xf] %v279
  %312 = vst [vmem:[%s2 + $0x2c] sm:$0xf] %v280
  %313 = vst [vmem:[%s2 + $0x30] sm:$0xf] %v281
  %314 = vst [vmem:[%s2 + $0x34] sm:$0xf] %v282
  %315 = vst [vmem:[%s2 + $0x38] sm:$0xf] %v283
  %316 = vst [vmem:[%s2 + $0x3c] sm:$0xf] %v284
  // Predicated region
  $region10: #{manual_gcn_forward.3} parent=0 // pred_check
    _
  $region11: #{manual_gcn_forward.3} parent=0 // pred_check_branch
    %318 = sbr.rel (0) target = $region13
  $region12: #{manual_gcn_forward.3} parent=0 // pred_region
    _
  $region13: #{manual_gcn_forward.3} parent=0 // pred_fallthru
    _
  // Predicated region
  $region14: #{manual_gcn_forward.3} parent=0 // pred_check
    _
  $region15: #{manual_gcn_forward.3} parent=0 // pred_check_branch
    %320 = sbr.rel (0) target = $region17
  $region16: #{manual_gcn_forward.3} parent=0 // pred_region
    _
  $region17: #{manual_gcn_forward.3} parent=0 // pred_fallthru
    _

// kernel: manual_gcn_forward.4
$region0: #{manual_gcn_forward.4}
  #allocation0 [shape = 'u32[]', space=smem, size = 0x4, offset = 0x4, fixed_abs, tag = 'smem constant byte address 0x4 - core index']
  #allocation1 [shape = 'u32[144,128]{1,0:T(1,128)}', space=vmem, size = 0x12000, scoped, tag = 'internal scratch']
  #allocation2 [shape = 'f32[128,128]{1,0:T(8,128)}', space=vmem, size = 0x10000, scoped, tag = 'scratch operand']
  %s0 = inlined_call_operand.vmem [shape: bf16[128,128], index: 0, kind: input, shape index: {}]
  %s1 = inlined_call_operand.vmem [shape: bf16[128,128], index: 1, kind: input, shape index: {}]
  %s2 = inlined_call_operand.vmem [shape: bf16[128,128], index: 2, kind: input, shape index: {}]
  %s3 = inlined_call_operand.vmem [shape: bf16[128,128], index: 3, kind: output, shape index: {}]
  %s4 = sld [smem:[#allocation0]]
  $region30: #{manual_gcn_forward.4} parent=0
    _
  %s6 = ssub.s32 1, %s4
  %s7 = scalar_select 0, %s6, %s4
  // Predicated region
  $region2: #{manual_gcn_forward.4} parent=0 // pred_check
    _
  $region3: #{manual_gcn_forward.4} parent=0 // pred_check_branch
    %9 = sbr.rel (0) target = $region5
  $region4: #{manual_gcn_forward.4} parent=0 // pred_region
    _
  $region5: #{manual_gcn_forward.4} parent=0 // pred_fallthru
    _
  // Predicated region
  $region6: #{manual_gcn_forward.4} parent=0 // pred_check
    _
  $region7: #{manual_gcn_forward.4} parent=0 // pred_check_branch
    %11 = sbr.rel (0) target = $region9
  $region8: #{manual_gcn_forward.4} parent=0 // pred_region
    _
  $region9: #{manual_gcn_forward.4} parent=0 // pred_fallthru
    _
  // Predicated region
  $region10: #{manual_gcn_forward.4} parent=0 // pred_check
    _
  $region11: #{manual_gcn_forward.4} parent=0 // pred_check_branch
    %13 = sbr.rel (0) target = $region13
  $region12: #{manual_gcn_forward.4} parent=0 // pred_region
    _
  $region13: #{manual_gcn_forward.4} parent=0 // pred_fallthru
    _
  %p15 = scmp.eq.s32.totalorder 0, 0
  // Predicated region
  $region14: #{manual_gcn_forward.4} parent=0 // pred_check
    %p16 = pneg %p15
  $region15: #{manual_gcn_forward.4} parent=0 // pred_check_branch
    %18 = sbr.rel (%p16) target = $region17
  $region16: #{manual_gcn_forward.4} parent=0 // pred_region
    %19 = vst [vmem:[#allocation2] sm:$0xff] 0.0
    %20 = vst [vmem:[#allocation2 + $0x8] sm:$0xff] 0.0
    %21 = vst [vmem:[#allocation2 + $0x10] sm:$0xff] 0.0
    %22 = vst [vmem:[#allocation2 + $0x18] sm:$0xff] 0.0
    %23 = vst [vmem:[#allocation2 + $0x20] sm:$0xff] 0.0
    %24 = vst [vmem:[#allocation2 + $0x28] sm:$0xff] 0.0
    %25 = vst [vmem:[#allocation2 + $0x30] sm:$0xff] 0.0
    %26 = vst [vmem:[#allocation2 + $0x38] sm:$0xff] 0.0
    %27 = vst [vmem:[#allocation2 + $0x40] sm:$0xff] 0.0
    %28 = vst [vmem:[#allocation2 + $0x48] sm:$0xff] 0.0
    %29 = vst [vmem:[#allocation2 + $0x50] sm:$0xff] 0.0
    %30 = vst [vmem:[#allocation2 + $0x58] sm:$0xff] 0.0
    %31 = vst [vmem:[#allocation2 + $0x60] sm:$0xff] 0.0
    %32 = vst [vmem:[#allocation2 + $0x68] sm:$0xff] 0.0
    %33 = vst [vmem:[#allocation2 + $0x70] sm:$0xff] 0.0
    %34 = vst [vmem:[#allocation2 + $0x78] sm:$0xff] 0.0
  $region17: #{manual_gcn_forward.4} parent=0 // pred_fallthru
    _
  %v35 = vld [vmem:[#allocation2] sm:$0xff]
  %v36 = vld [vmem:[#allocation2 + $0x8] sm:$0xff]
  %v37 = vld [vmem:[#allocation2 + $0x10] sm:$0xff]
  %v38 = vld [vmem:[#allocation2 + $0x18] sm:$0xff]
  %v39 = vld [vmem:[#allocation2 + $0x20] sm:$0xff]
  %v40 = vld [vmem:[#allocation2 + $0x28] sm:$0xff]
  %v41 = vld [vmem:[#allocation2 + $0x30] sm:$0xff]
  %v42 = vld [vmem:[#allocation2 + $0x38] sm:$0xff]
  %v43 = vld [vmem:[#allocation2 + $0x40] sm:$0xff]
  %v44 = vld [vmem:[#allocation2 + $0x48] sm:$0xff]
  %v45 = vld [vmem:[#allocation2 + $0x50] sm:$0xff]
  %v46 = vld [vmem:[#allocation2 + $0x58] sm:$0xff]
  %v47 = vld [vmem:[#allocation2 + $0x60] sm:$0xff]
  %v48 = vld [vmem:[#allocation2 + $0x68] sm:$0xff]
  %v49 = vld [vmem:[#allocation2 + $0x70] sm:$0xff]
  %v50 = vld [vmem:[#allocation2 + $0x78] sm:$0xff]
  %v51 = vld [vmem:[%s0] sm:$0xf]
  %v52 = vld [vmem:[%s0 + $0x4] sm:$0xf]
  %v53 = vld [vmem:[%s0 + $0x8] sm:$0xf]
  %v54 = vld [vmem:[%s0 + $0xc] sm:$0xf]
  %v55 = vld [vmem:[%s0 + $0x10] sm:$0xf]
  %v56 = vld [vmem:[%s0 + $0x14] sm:$0xf]
  %v57 = vld [vmem:[%s0 + $0x18] sm:$0xf]
  %v58 = vld [vmem:[%s0 + $0x1c] sm:$0xf]
  %v59 = vld [vmem:[%s0 + $0x20] sm:$0xf]
  %v60 = vld [vmem:[%s0 + $0x24] sm:$0xf]
  %v61 = vld [vmem:[%s0 + $0x28] sm:$0xf]
  %v62 = vld [vmem:[%s0 + $0x2c] sm:$0xf]
  %v63 = vld [vmem:[%s0 + $0x30] sm:$0xf]
  %v64 = vld [vmem:[%s0 + $0x34] sm:$0xf]
  %v65 = vld [vmem:[%s0 + $0x38] sm:$0xf]
  %v66 = vld [vmem:[%s0 + $0x3c] sm:$0xf]
  %v67 = vld [vmem:[%s1] sm:$0xf]
  %v68 = vld [vmem:[%s1 + $0x4] sm:$0xf]
  %v69 = vld [vmem:[%s1 + $0x8] sm:$0xf]
  %v70 = vld [vmem:[%s1 + $0xc] sm:$0xf]
  %v71 = vld [vmem:[%s1 + $0x10] sm:$0xf]
  %v72 = vld [vmem:[%s1 + $0x14] sm:$0xf]
  %v73 = vld [vmem:[%s1 + $0x18] sm:$0xf]
  %v74 = vld [vmem:[%s1 + $0x1c] sm:$0xf]
  %v75 = vld [vmem:[%s1 + $0x20] sm:$0xf]
  %v76 = vld [vmem:[%s1 + $0x24] sm:$0xf]
  %v77 = vld [vmem:[%s1 + $0x28] sm:$0xf]
  %v78 = vld [vmem:[%s1 + $0x2c] sm:$0xf]
  %v79 = vld [vmem:[%s1 + $0x30] sm:$0xf]
  %v80 = vld [vmem:[%s1 + $0x34] sm:$0xf]
  %v81 = vld [vmem:[%s1 + $0x38] sm:$0xf]
  %v82 = vld [vmem:[%s1 + $0x3c] sm:$0xf]
  %v99 = vunpack.c.l.b16 %v51
  %v100 = vunpack.c.l.b16 %v52
  %v101 = vunpack.c.l.b16 %v53
  %v102 = vunpack.c.l.b16 %v54
  %v103 = vunpack.c.l.b16 %v55
  %v104 = vunpack.c.l.b16 %v56
  %v105 = vunpack.c.l.b16 %v57
  %v106 = vunpack.c.l.b16 %v58
  %v107 = vunpack.c.l.b16 %v59
  %v108 = vunpack.c.l.b16 %v60
  %v109 = vunpack.c.l.b16 %v61
  %v110 = vunpack.c.l.b16 %v62
  %v111 = vunpack.c.l.b16 %v63
  %v112 = vunpack.c.l.b16 %v64
  %v113 = vunpack.c.l.b16 %v65
  %v114 = vunpack.c.l.b16 %v66
  %v115 = vpack.c.b16 %v100, %v99
  %v116 = vpack.c.b16 %v102, %v101
  %v117 = vpack.c.b16 %v104, %v103
  %v118 = vpack.c.b16 %v106, %v105
  %v119 = vpack.c.b16 %v108, %v107
  %v120 = vpack.c.b16 %v110, %v109
  %v121 = vpack.c.b16 %v112, %v111
  %v122 = vpack.c.b16 %v114, %v113
  %v147 = vunpack.c.l.b16 %v67
  %v148 = vunpack.c.l.b16 %v68
  %v149 = vunpack.c.l.b16 %v69
  %v150 = vunpack.c.l.b16 %v70
  %v151 = vunpack.c.l.b16 %v71
  %v152 = vunpack.c.l.b16 %v72
  %v153 = vunpack.c.l.b16 %v73
  %v154 = vunpack.c.l.b16 %v74
  %v155 = vunpack.c.l.b16 %v75
  %v156 = vunpack.c.l.b16 %v76
  %v157 = vunpack.c.l.b16 %v77
  %v158 = vunpack.c.l.b16 %v78
  %v159 = vunpack.c.l.b16 %v79
  %v160 = vunpack.c.l.b16 %v80
  %v161 = vunpack.c.l.b16 %v81
  %v162 = vunpack.c.l.b16 %v82
  %v163 = vpack.c.b16 %v148, %v147
  %v164 = vpack.c.b16 %v150, %v149
  %v165 = vpack.c.b16 %v152, %v151
  %v166 = vpack.c.b16 %v154, %v153
  %v167 = vpack.c.b16 %v156, %v155
  %v168 = vpack.c.b16 %v158, %v157
  %v169 = vpack.c.b16 %v160, %v159
  %v170 = vpack.c.b16 %v162, %v161
  %179 = vmatprep.subr.bf16.mxu0 0
  %180 = vmatpush1.bf16.msra.mxu0 %v170
  %181 = vmatprep.subr.bf16.mxu0 0
  %182 = vmatpush1.bf16.msra.mxu0 %v169
  %183 = vmatprep.subr.bf16.mxu0 0
  %184 = vmatpush1.bf16.msra.mxu0 %v168
  %185 = vmatprep.subr.bf16.mxu0 0
  %186 = vmatpush1.bf16.msra.mxu0 %v167
  %187 = vmatprep.subr.bf16.mxu0 0
  %188 = vmatpush1.bf16.msra.mxu0 %v166
  %189 = vmatprep.subr.bf16.mxu0 0
  %190 = vmatpush1.bf16.msra.mxu0 %v165
  %191 = vmatprep.subr.bf16.mxu0 0
  %192 = vmatpush1.bf16.msra.mxu0 %v164
  %193 = vmatprep.subr.bf16.mxu0 0
  %194 = vmatpush1.bf16.msra.mxu0 %v163
  %195 = vmatprep.subr.bf16.mxu0 0
  %196 = vmatpush2.bf16.msra.mxu0 0
  %197 = vmatprep.subr.bf16.mxu0 0
  %198 = vmatpush2.bf16.msra.mxu0 0
  %199 = vmatprep.subr.bf16.mxu0 0
  %200 = vmatpush2.bf16.msra.mxu0 0
  %201 = vmatprep.subr.bf16.mxu0 0
  %202 = vmatpush2.bf16.msra.mxu0 0
  %203 = vmatprep.subr.bf16.mxu0 0
  %204 = vmatpush2.bf16.msra.mxu0 0
  %205 = vmatprep.subr.bf16.mxu0 0
  %206 = vmatpush2.bf16.msra.mxu0 0
  %207 = vmatprep.subr.bf16.mxu0 0
  %208 = vmatpush2.bf16.msra.mxu0 0
  %209 = vmatprep.subr.bf16.mxu0 0
  %210 = vmatpush2.bf16.msra.mxu0 0
  %211 = vmatprep.mubr.bf16.mxu0 0
  %212 = vmatmul.mubr.bf16.gmra.mxu0 %v115
  %v213 = vpop.f32.mrf.mxu0
  %v214 = vadd.f32 0.0, %v213
  %v215 = vpop.f32.mrf.mxu0
  %v216 = vpop.f32.mrf.mxu0
  %v217 = vadd.f32 0.0, %v216
  %v218 = vpop.f32.mrf.mxu0
  %219 = vmatprep.mubr.bf16.mxu0 0
  %220 = vmatmul.mubr.bf16.gmra.mxu0 %v116
  %v221 = vpop.f32.mrf.mxu0
  %v222 = vadd.f32 0.0, %v221
  %v223 = vpop.f32.mrf.mxu0
  %v224 = vpop.f32.mrf.mxu0
  %v225 = vadd.f32 0.0, %v224
  %v226 = vpop.f32.mrf.mxu0
  %227 = vmatprep.mubr.bf16.mxu0 0
  %228 = vmatmul.mubr.bf16.gmra.mxu0 %v117
  %v229 = vpop.f32.mrf.mxu0
  %v230 = vadd.f32 0.0, %v229
  %v231 = vpop.f32.mrf.mxu0
  %v232 = vpop.f32.mrf.mxu0
  %v233 = vadd.f32 0.0, %v232
  %v234 = vpop.f32.mrf.mxu0
  %235 = vmatprep.mubr.bf16.mxu0 0
  %236 = vmatmul.mubr.bf16.gmra.mxu0 %v118
  %v237 = vpop.f32.mrf.mxu0
  %v238 = vadd.f32 0.0, %v237
  %v239 = vpop.f32.mrf.mxu0
  %v240 = vpop.f32.mrf.mxu0
  %v241 = vadd.f32 0.0, %v240
  %v242 = vpop.f32.mrf.mxu0
  %243 = vmatprep.mubr.bf16.mxu0 0
  %244 = vmatmul.mubr.bf16.gmra.mxu0 %v119
  %v245 = vpop.f32.mrf.mxu0
  %v246 = vadd.f32 0.0, %v245
  %v247 = vpop.f32.mrf.mxu0
  %v248 = vpop.f32.mrf.mxu0
  %v249 = vadd.f32 0.0, %v248
  %v250 = vpop.f32.mrf.mxu0
  %251 = vmatprep.mubr.bf16.mxu0 0
  %252 = vmatmul.mubr.bf16.gmra.mxu0 %v120
  %v253 = vpop.f32.mrf.mxu0
  %v254 = vadd.f32 0.0, %v253
  %v255 = vpop.f32.mrf.mxu0
  %v256 = vpop.f32.mrf.mxu0
  %v257 = vadd.f32 0.0, %v256
  %v258 = vpop.f32.mrf.mxu0
  %259 = vmatprep.mubr.bf16.mxu0 0
  %260 = vmatmul.mubr.bf16.gmra.mxu0 %v121
  %v261 = vpop.f32.mrf.mxu0
  %v262 = vadd.f32 0.0, %v261
  %v263 = vpop.f32.mrf.mxu0
  %v264 = vpop.f32.mrf.mxu0
  %v265 = vadd.f32 0.0, %v264
  %v266 = vpop.f32.mrf.mxu0
  %267 = vmatprep.mubr.bf16.mxu0 0
  %268 = vmatmul.mubr.bf16.gmra.mxu0 %v122
  %v269 = vpop.f32.mrf.mxu0
  %v270 = vadd.f32 0.0, %v269
  %v271 = vpop.f32.mrf.mxu0
  %v272 = vpop.f32.mrf.mxu0
  %v273 = vadd.f32 0.0, %v272
  %v274 = vpop.f32.mrf.mxu0
  %275 = vdwg.mxu0
  %v276 = vadd.f32 %v35, %v214
  %v277 = vadd.f32 %v36, %v217
  %v278 = vadd.f32 %v37, %v222
  %v279 = vadd.f32 %v38, %v225
  %v280 = vadd.f32 %v39, %v230
  %v281 = vadd.f32 %v40, %v233
  %v282 = vadd.f32 %v41, %v238
  %v283 = vadd.f32 %v42, %v241
  %v284 = vadd.f32 %v43, %v246
  %v285 = vadd.f32 %v44, %v249
  %v286 = vadd.f32 %v45, %v254
  %v287 = vadd.f32 %v46, %v257
  %v288 = vadd.f32 %v47, %v262
  %v289 = vadd.f32 %v48, %v265
  %v290 = vadd.f32 %v49, %v270
  %v291 = vadd.f32 %v50, %v273
  %292 = vst [vmem:[#allocation2] sm:$0xff] %v276
  %293 = vst [vmem:[#allocation2 + $0x8] sm:$0xff] %v277
  %294 = vst [vmem:[#allocation2 + $0x10] sm:$0xff] %v278
  %295 = vst [vmem:[#allocation2 + $0x18] sm:$0xff] %v279
  %296 = vst [vmem:[#allocation2 + $0x20] sm:$0xff] %v280
  %297 = vst [vmem:[#allocation2 + $0x28] sm:$0xff] %v281
  %298 = vst [vmem:[#allocation2 + $0x30] sm:$0xff] %v282
  %299 = vst [vmem:[#allocation2 + $0x38] sm:$0xff] %v283
  %300 = vst [vmem:[#allocation2 + $0x40] sm:$0xff] %v284
  %301 = vst [vmem:[#allocation2 + $0x48] sm:$0xff] %v285
  %302 = vst [vmem:[#allocation2 + $0x50] sm:$0xff] %v286
  %303 = vst [vmem:[#allocation2 + $0x58] sm:$0xff] %v287
  %304 = vst [vmem:[#allocation2 + $0x60] sm:$0xff] %v288
  %305 = vst [vmem:[#allocation2 + $0x68] sm:$0xff] %v289
  %306 = vst [vmem:[#allocation2 + $0x70] sm:$0xff] %v290
  %307 = vst [vmem:[#allocation2 + $0x78] sm:$0xff] %v291
  // Predicated region
  $region18: #{manual_gcn_forward.4} parent=0 // pred_check
    %p308 = pneg %p15
  $region19: #{manual_gcn_forward.4} parent=0 // pred_check_branch
    %310 = sbr.rel (%p308) target = $region21
  $region20: #{manual_gcn_forward.4} parent=0 // pred_region
    %v311 = vld [vmem:[#allocation2] sm:$0xff]
    %v312 = vld [vmem:[#allocation2 + $0x8] sm:$0xff]
    %v313 = vld [vmem:[#allocation2 + $0x10] sm:$0xff]
    %v314 = vld [vmem:[#allocation2 + $0x18] sm:$0xff]
    %v315 = vld [vmem:[#allocation2 + $0x20] sm:$0xff]
    %v316 = vld [vmem:[#allocation2 + $0x28] sm:$0xff]
    %v317 = vld [vmem:[#allocation2 + $0x30] sm:$0xff]
    %v318 = vld [vmem:[#allocation2 + $0x38] sm:$0xff]
    %v319 = vld [vmem:[#allocation2 + $0x40] sm:$0xff]
    %v320 = vld [vmem:[#allocation2 + $0x48] sm:$0xff]
    %v321 = vld [vmem:[#allocation2 + $0x50] sm:$0xff]
    %v322 = vld [vmem:[#allocation2 + $0x58] sm:$0xff]
    %v323 = vld [vmem:[#allocation2 + $0x60] sm:$0xff]
    %v324 = vld [vmem:[#allocation2 + $0x68] sm:$0xff]
    %v325 = vld [vmem:[#allocation2 + $0x70] sm:$0xff]
    %v326 = vld [vmem:[#allocation2 + $0x78] sm:$0xff]
    %v327 = vmax.f32 %v311, 0.0
    %v328 = vmax.f32 %v312, 0.0
    %v329 = vmax.f32 %v313, 0.0
    %v330 = vmax.f32 %v314, 0.0
    %v331 = vmax.f32 %v315, 0.0
    %v332 = vmax.f32 %v316, 0.0
    %v333 = vmax.f32 %v317, 0.0
    %v334 = vmax.f32 %v318, 0.0
    %v335 = vmax.f32 %v319, 0.0
    %v336 = vmax.f32 %v320, 0.0
    %v337 = vmax.f32 %v321, 0.0
    %v338 = vmax.f32 %v322, 0.0
    %v339 = vmax.f32 %v323, 0.0
    %v340 = vmax.f32 %v324, 0.0
    %v341 = vmax.f32 %v325, 0.0
    %v342 = vmax.f32 %v326, 0.0
    %v343 = vpack.c.bf16 %v328, %v327
    %v344 = vpack.c.bf16 %v330, %v329
    %v345 = vpack.c.bf16 %v332, %v331
    %v346 = vpack.c.bf16 %v334, %v333
    %v347 = vpack.c.bf16 %v336, %v335
    %v348 = vpack.c.bf16 %v338, %v337
    %v349 = vpack.c.bf16 %v340, %v339
    %v350 = vpack.c.bf16 %v342, %v341
    %v351 = vld [vmem:[%s2] sm:$0xf]
    %v352 = vld [vmem:[%s2 + $0x4] sm:$0xf]
    %v353 = vld [vmem:[%s2 + $0x8] sm:$0xf]
    %v354 = vld [vmem:[%s2 + $0xc] sm:$0xf]
    %v355 = vld [vmem:[%s2 + $0x10] sm:$0xf]
    %v356 = vld [vmem:[%s2 + $0x14] sm:$0xf]
    %v357 = vld [vmem:[%s2 + $0x18] sm:$0xf]
    %v358 = vld [vmem:[%s2 + $0x1c] sm:$0xf]
    %v359 = vld [vmem:[%s2 + $0x20] sm:$0xf]
    %v360 = vld [vmem:[%s2 + $0x24] sm:$0xf]
    %v361 = vld [vmem:[%s2 + $0x28] sm:$0xf]
    %v362 = vld [vmem:[%s2 + $0x2c] sm:$0xf]
    %v363 = vld [vmem:[%s2 + $0x30] sm:$0xf]
    %v364 = vld [vmem:[%s2 + $0x34] sm:$0xf]
    %v365 = vld [vmem:[%s2 + $0x38] sm:$0xf]
    %v366 = vld [vmem:[%s2 + $0x3c] sm:$0xf]
    %v383 = vunpack.c.l.b16 %v351
    %v384 = vunpack.c.l.b16 %v352
    %v385 = vunpack.c.l.b16 %v353
    %v386 = vunpack.c.l.b16 %v354
    %v387 = vunpack.c.l.b16 %v355
    %v388 = vunpack.c.l.b16 %v356
    %v389 = vunpack.c.l.b16 %v357
    %v390 = vunpack.c.l.b16 %v358
    %v391 = vunpack.c.l.b16 %v359
    %v392 = vunpack.c.l.b16 %v360
    %v393 = vunpack.c.l.b16 %v361
    %v394 = vunpack.c.l.b16 %v362
    %v395 = vunpack.c.l.b16 %v363
    %v396 = vunpack.c.l.b16 %v364
    %v397 = vunpack.c.l.b16 %v365
    %v398 = vunpack.c.l.b16 %v366
    %v399 = vpack.c.b16 %v384, %v383
    %v400 = vpack.c.b16 %v386, %v385
    %v401 = vpack.c.b16 %v388, %v387
    %v402 = vpack.c.b16 %v390, %v389
    %v403 = vpack.c.b16 %v392, %v391
    %v404 = vpack.c.b16 %v394, %v393
    %v405 = vpack.c.b16 %v396, %v395
    %v406 = vpack.c.b16 %v398, %v397
    %415 = vmatprep.subr.bf16.mxu0 0
    %416 = vmatpush1.bf16.msra.mxu0 %v406
    %417 = vmatprep.subr.bf16.mxu0 0
    %418 = vmatpush1.bf16.msra.mxu0 %v405
    %419 = vmatprep.subr.bf16.mxu0 0
    %420 = vmatpush1.bf16.msra.mxu0 %v404
    %421 = vmatprep.subr.bf16.mxu0 0
    %422 = vmatpush1.bf16.msra.mxu0 %v403
    %423 = vmatprep.subr.bf16.mxu0 0
    %424 = vmatpush1.bf16.msra.mxu0 %v402
    %425 = vmatprep.subr.bf16.mxu0 0
    %426 = vmatpush1.bf16.msra.mxu0 %v401
    %427 = vmatprep.subr.bf16.mxu0 0
    %428 = vmatpush1.bf16.msra.mxu0 %v400
    %429 = vmatprep.subr.bf16.mxu0 0
    %430 = vmatpush1.bf16.msra.mxu0 %v399
    %431 = vmatprep.subr.bf16.mxu0 0
    %432 = vmatpush2.bf16.msra.mxu0 0
    %433 = vmatprep.subr.bf16.mxu0 0
    %434 = vmatpush2.bf16.msra.mxu0 0
    %435 = vmatprep.subr.bf16.mxu0 0
    %436 = vmatpush2.bf16.msra.mxu0 0
    %437 = vmatprep.subr.bf16.mxu0 0
    %438 = vmatpush2.bf16.msra.mxu0 0
    %439 = vmatprep.subr.bf16.mxu0 0
    %440 = vmatpush2.bf16.msra.mxu0 0
    %441 = vmatprep.subr.bf16.mxu0 0
    %442 = vmatpush2.bf16.msra.mxu0 0
    %443 = vmatprep.subr.bf16.mxu0 0
    %444 = vmatpush2.bf16.msra.mxu0 0
    %445 = vmatprep.subr.bf16.mxu0 0
    %446 = vmatpush2.bf16.msra.mxu0 0
    %447 = vmatprep.mubr.bf16.mxu0 0
    %448 = vmatmul.mubr.bf16.gmra.mxu0 %v343
    %v449 = vpop.f32.mrf.mxu0
    %v450 = vadd.f32 0.0, %v449
    %v451 = vpop.f32.mrf.mxu0
    %v452 = vpop.f32.mrf.mxu0
    %v453 = vadd.f32 0.0, %v452
    %v454 = vpop.f32.mrf.mxu0
    %455 = vmatprep.mubr.bf16.mxu0 0
    %456 = vmatmul.mubr.bf16.gmra.mxu0 %v344
    %v457 = vpop.f32.mrf.mxu0
    %v458 = vadd.f32 0.0, %v457
    %v459 = vpop.f32.mrf.mxu0
    %v460 = vpop.f32.mrf.mxu0
    %v461 = vadd.f32 0.0, %v460
    %v462 = vpop.f32.mrf.mxu0
    %463 = vmatprep.mubr.bf16.mxu0 0
    %464 = vmatmul.mubr.bf16.gmra.mxu0 %v345
    %v465 = vpop.f32.mrf.mxu0
    %v466 = vadd.f32 0.0, %v465
    %v467 = vpop.f32.mrf.mxu0
    %v468 = vpop.f32.mrf.mxu0
    %v469 = vadd.f32 0.0, %v468
    %v470 = vpop.f32.mrf.mxu0
    %471 = vmatprep.mubr.bf16.mxu0 0
    %472 = vmatmul.mubr.bf16.gmra.mxu0 %v346
    %v473 = vpop.f32.mrf.mxu0
    %v474 = vadd.f32 0.0, %v473
    %v475 = vpop.f32.mrf.mxu0
    %v476 = vpop.f32.mrf.mxu0
    %v477 = vadd.f32 0.0, %v476
    %v478 = vpop.f32.mrf.mxu0
    %479 = vmatprep.mubr.bf16.mxu0 0
    %480 = vmatmul.mubr.bf16.gmra.mxu0 %v347
    %v481 = vpop.f32.mrf.mxu0
    %v482 = vadd.f32 0.0, %v481
    %v483 = vpop.f32.mrf.mxu0
    %v484 = vpop.f32.mrf.mxu0
    %v485 = vadd.f32 0.0, %v484
    %v486 = vpop.f32.mrf.mxu0
    %487 = vmatprep.mubr.bf16.mxu0 0
    %488 = vmatmul.mubr.bf16.gmra.mxu0 %v348
    %v489 = vpop.f32.mrf.mxu0
    %v490 = vadd.f32 0.0, %v489
    %v491 = vpop.f32.mrf.mxu0
    %v492 = vpop.f32.mrf.mxu0
    %v493 = vadd.f32 0.0, %v492
    %v494 = vpop.f32.mrf.mxu0
    %495 = vmatprep.mubr.bf16.mxu0 0
    %496 = vmatmul.mubr.bf16.gmra.mxu0 %v349
    %v497 = vpop.f32.mrf.mxu0
    %v498 = vadd.f32 0.0, %v497
    %v499 = vpop.f32.mrf.mxu0
    %v500 = vpop.f32.mrf.mxu0
    %v501 = vadd.f32 0.0, %v500
    %v502 = vpop.f32.mrf.mxu0
    %503 = vmatprep.mubr.bf16.mxu0 0
    %504 = vmatmul.mubr.bf16.gmra.mxu0 %v350
    %v505 = vpop.f32.mrf.mxu0
    %v506 = vadd.f32 0.0, %v505
    %v507 = vpop.f32.mrf.mxu0
    %v508 = vpop.f32.mrf.mxu0
    %v509 = vadd.f32 0.0, %v508
    %v510 = vpop.f32.mrf.mxu0
    %511 = vdwg.mxu0
    %v512 = vpack.c.bf16 %v453, %v450
    %v513 = vpack.c.bf16 %v461, %v458
    %v514 = vpack.c.bf16 %v469, %v466
    %v515 = vpack.c.bf16 %v477, %v474
    %v516 = vpack.c.bf16 %v485, %v482
    %v517 = vpack.c.bf16 %v493, %v490
    %v518 = vpack.c.bf16 %v501, %v498
    %v519 = vpack.c.bf16 %v509, %v506
    %v528 = vunpack.c.l.b16 %v512
    %v529 = vunpack.c.h.b16 %v512
    %v530 = vunpack.c.l.b16 %v513
    %v531 = vunpack.c.h.b16 %v513
    %v532 = vunpack.c.l.b16 %v514
    %v533 = vunpack.c.h.b16 %v514
    %v534 = vunpack.c.l.b16 %v515
    %v535 = vunpack.c.h.b16 %v515
    %v536 = vunpack.c.l.b16 %v516
    %v537 = vunpack.c.h.b16 %v516
    %v538 = vunpack.c.l.b16 %v517
    %v539 = vunpack.c.h.b16 %v517
    %v540 = vunpack.c.l.b16 %v518
    %v541 = vunpack.c.h.b16 %v518
    %v542 = vunpack.c.l.b16 %v519
    %v543 = vunpack.c.h.b16 %v519
    %v544 = vpack.c.b16 %v528, %v528
    %v545 = vpack.c.b16 %v529, %v529
    %v546 = vpack.c.b16 %v530, %v530
    %v547 = vpack.c.b16 %v531, %v531
    %v548 = vpack.c.b16 %v532, %v532
    %v549 = vpack.c.b16 %v533, %v533
    %v550 = vpack.c.b16 %v534, %v534
    %v551 = vpack.c.b16 %v535, %v535
    %v552 = vpack.c.b16 %v536, %v536
    %v553 = vpack.c.b16 %v537, %v537
    %v554 = vpack.c.b16 %v538, %v538
    %v555 = vpack.c.b16 %v539, %v539
    %v556 = vpack.c.b16 %v540, %v540
    %v557 = vpack.c.b16 %v541, %v541
    %v558 = vpack.c.b16 %v542, %v542
    %v559 = vpack.c.b16 %v543, %v543
    %576 = vst [vmem:[%s3] sm:$0xf] %v544
    %577 = vst [vmem:[%s3 + $0x4] sm:$0xf] %v545
    %578 = vst [vmem:[%s3 + $0x8] sm:$0xf] %v546
    %579 = vst [vmem:[%s3 + $0xc] sm:$0xf] %v547
    %580 = vst [vmem:[%s3 + $0x10] sm:$0xf] %v548
    %581 = vst [vmem:[%s3 + $0x14] sm:$0xf] %v549
    %582 = vst [vmem:[%s3 + $0x18] sm:$0xf] %v550
    %583 = vst [vmem:[%s3 + $0x1c] sm:$0xf] %v551
    %584 = vst [vmem:[%s3 + $0x20] sm:$0xf] %v552
    %585 = vst [vmem:[%s3 + $0x24] sm:$0xf] %v553
    %586 = vst [vmem:[%s3 + $0x28] sm:$0xf] %v554
    %587 = vst [vmem:[%s3 + $0x2c] sm:$0xf] %v555
    %588 = vst [vmem:[%s3 + $0x30] sm:$0xf] %v556
    %589 = vst [vmem:[%s3 + $0x34] sm:$0xf] %v557
    %590 = vst [vmem:[%s3 + $0x38] sm:$0xf] %v558
    %591 = vst [vmem:[%s3 + $0x3c] sm:$0xf] %v559
  $region21: #{manual_gcn_forward.4} parent=0 // pred_fallthru
    _
  // Predicated region
  $region22: #{manual_gcn_forward.4} parent=0 // pred_check
    _
  $region23: #{manual_gcn_forward.4} parent=0 // pred_check_branch
    %593 = sbr.rel (0) target = $region25
  $region24: #{manual_gcn_forward.4} parent=0 // pred_region
    _
  $region25: #{manual_gcn_forward.4} parent=0 // pred_fallthru
    _
  // Predicated region
  $region26: #{manual_gcn_forward.4} parent=0 // pred_check
    _
  $region27: #{manual_gcn_forward.4} parent=0 // pred_check_branch
    %595 = sbr.rel (0) target = $region29
  $region28: #{manual_gcn_forward.4} parent=0 // pred_region
    _
  $region29: #{manual_gcn_forward.4} parent=0 // pred_fallthru
    _

</llo_original>
